<compile_context>
chip_gen: v6e
topology: v6e:2x2x1
jax: 0.10.0
libtpu: 0.0.40
codegen_flags: <defaults>
</compile_context>

<pallas_src>
import functools

import jax
import jax.numpy as jnp
import numpy as np
from jax.experimental import pallas as pl
from jax.experimental.pallas import tpu as pltpu


def _fold_bn(gamma, beta, mean, var, eps=1e-5):
    scale = gamma / jnp.sqrt(var + eps)
    shift = beta - mean * scale
    return scale, shift


def _pick_group(W, c, target=128):
    """Smallest divisor g of W with g*c >= target lanes (else W).

    128 matches the v5e MXU tile; on v6e/v7x the 256-wide MXU still runs K=128
    matmuls fine and the smaller g minimizes the redundant block-diagonal MACs.
    """
    for g in range(1, W + 1):
        if W % g == 0 and g * c >= target:
            return g
    return W


def _mobilev2_kernel(*refs, H, W, cin, hidden, oup, dilation, expand,
                     use_res, g1, g2):
    if expand:
        (x_ref, w1_ref, b1_ref, tap_ref, b2_ref, w3_ref, b3_ref,
         o_ref, hpad_ref) = refs
    else:
        x_ref, tap_ref, b2_ref, w3_ref, b3_ref, o_ref, hpad_ref = refs

    nb = x_ref.shape[0]
    pad = dilation
    w_hid = W * hidden
    rows = nb * H
    shift = dilation * hidden

    # H halos: zeroed every step (cheap: 2*pad rows).  Not gated on
    # program_id==0 because the scratch is per-core under megacore sharding.
    hpad_ref[:, 0:pad, :] = jnp.zeros((nb, pad, w_hid), jnp.float32)
    hpad_ref[:, pad + H:pad + H + pad, :] = jnp.zeros((nb, pad, w_hid),
                                                      jnp.float32)

    # ---- expand: 1x1 conv (BN1 folded) + ReLU6, streamed per lane group ----
    if expand:
        ng1 = W // g1
        for grp in range(ng1):
            xs = slice(grp * g1 * cin, (grp + 1) * g1 * cin)
            hs = slice(grp * g1 * hidden, (grp + 1) * g1 * hidden)
            xg = x_ref[:, :, xs].reshape(rows, g1 * cin)
            hg = jnp.dot(xg.astype(jnp.bfloat16), w1_ref[...],
                         preferred_element_type=jnp.float32)
            hg = jnp.clip(hg + b1_ref[:, hs], 0.0, 6.0)
            hpad_ref[:, pad:pad + H, hs] = hg.reshape(nb, H, g1 * hidden)
    else:
        hpad_ref[:, pad:pad + H, :] = x_ref[...].astype(jnp.float32)

    # ---- depthwise 3x3: VPU/XLU stencil (no MXU, no banded matrices) ----
    # H-shift from the zero-haloed slabs; W-shift via lane rolls of
    # +-dilation*hidden lanes.  The W-edge masks and BN2 scale are folded into
    # the per-(kh, kw) tap vectors, so wrapped lanes get multiplied by zero.
    acc = jnp.zeros((rows, w_hid), jnp.float32)
    for kh in range(3):
        slab = hpad_ref[:, kh * dilation: kh * dilation + H, :]
        slab = slab.reshape(rows, w_hid)
        left = pltpu.roll(slab, shift, axis=1)            # source column w-dil
        right = pltpu.roll(slab, w_hid - shift, axis=1)   # source column w+dil
        acc = acc + left * tap_ref[3 * kh + 0:3 * kh + 1, :]
        acc = acc + slab * tap_ref[3 * kh + 1:3 * kh + 2, :]
        acc = acc + right * tap_ref[3 * kh + 2:3 * kh + 3, :]
    d = jnp.clip(acc + b2_ref[...], 0.0, 6.0)

    # ---- project: 1x1 conv (BN3 folded) + bias (+ residual), per group ----
    ng2 = W // g2
    for grp in range(ng2):
        ds_ = slice(grp * g2 * hidden, (grp + 1) * g2 * hidden)
        os_ = slice(grp * g2 * oup, (grp + 1) * g2 * oup)
        yg = jnp.dot(d[:, ds_].astype(jnp.bfloat16), w3_ref[...],
                     preferred_element_type=jnp.float32)
        yg = yg + b3_ref[:, os_]
        if use_res:   # cin == oup, so the x lane slice matches the out slice
            xs = slice(grp * g2 * cin, (grp + 1) * g2 * cin)
            yg = yg + x_ref[:, :, xs].reshape(rows, g2 * cin).astype(jnp.float32)
        o_ref[:, :, os_] = yg.reshape(nb, H, g2 * oup).astype(o_ref.dtype)


def mobilev2_residual(x_nchw, params, *, stride=1, expanse_ratio=2, dilation=1):
    # TODO(synk): stride=2 needs a strided output row/col mapping; only stride=1 here.
    assert stride == 1
    N, cin, H, W = x_nchw.shape
    hidden = int(cin * expanse_ratio)
    expand = expanse_ratio != 1
    oup = params["w3"].shape[0]
    use_res = (stride == 1) and (cin == oup)
    pad = dilation

    w_cin, w_hid, w_oup = W * cin, W * hidden, W * oup

    # Lane-group sizes for the 1x1 convs (MXU K tile and lane-dense stores).
    g1 = _pick_group(W, cin) if expand else W
    g2 = _pick_group(W, min(hidden, oup))

    # TODO(synk): keep the lane-packed NHWC layout across layers to avoid these
    # per-call NCHW<->lane-packed HBM transposes.
    x_lane = jnp.transpose(x_nchw, (0, 2, 3, 1)).reshape(N, H, w_cin)

    inputs = [x_lane]
    weight_bytes = 0

    # ---- expand weights: BN1 scale folded into columns, block-diag over g1 ----
    if expand:
        s1, b1 = _fold_bn(*params["bn1"])
        w1 = params["w1"][:, :, 0, 0].T * s1[None, :]              # (cin, hidden)
        w1_g = jnp.kron(jnp.eye(g1, dtype=jnp.float32), w1).astype(jnp.bfloat16)
        b1_v = jnp.tile(b1, W).reshape(1, w_hid).astype(jnp.float32)
        inputs += [w1_g, b1_v]
        weight_bytes += w1_g.size * 2 + b1_v.size * 4

    # ---- depthwise tap vectors: BN2 scale + W-edge masks folded in ----
    s2, b2 = _fold_bn(*params["bn2"])
    taps = jnp.transpose(params["wdw"][:, 0, :, :], (1, 2, 0)) * s2  # (3,3,hid)
    mask = np.ones((3, W), np.float32)
    mask[0, :dilation] = 0.0            # kw=0 reads column w-dil (invalid w<dil)
    mask[2, W - dilation:] = 0.0        # kw=2 reads column w+dil (invalid w>=W-dil)
    tap_rows = []
    for kh in range(3):
        for kw in range(3):
            lane_mask = jnp.asarray(np.repeat(mask[kw], hidden))
            tap_rows.append(jnp.tile(taps[kh, kw], W) * lane_mask)
    tap_v = jnp.stack(tap_rows).astype(jnp.float32)                 # (9, W*hid)
    b2_v = jnp.tile(b2, W).reshape(1, w_hid).astype(jnp.float32)

    # ---- project weights: BN3 scale folded into columns, block-diag over g2 ----
    s3, b3 = _fold_bn(*params["bn3"])
    w3 = params["w3"][:, :, 0, 0].T * s3[None, :]                   # (hidden, oup)
    w3_g = jnp.kron(jnp.eye(g2, dtype=jnp.float32), w3).astype(jnp.bfloat16)
    b3_v = jnp.tile(b3, W).reshape(1, w_oup).astype(jnp.float32)

    inputs += [tap_v, b2_v, w3_g, b3_v]
    weight_bytes += tap_v.size * 4 + b2_v.size * 4 + w3_g.size * 2 + b3_v.size * 4

    # ---- batch block: scratch + f32 stencil temps + double-buffered x/out ----
    per_img = 4 * ((H + 2 * pad) * w_hid        # hpad scratch
                   + 5 * H * w_hid              # acc / rolled temps / d
                   + 2 * H * (w_cin + w_oup))   # 2x pipeline buffers for x/out
    budget = 40 * 1024 * 1024 - 2 * weight_bytes
    cap = max(1, min(N, budget // max(per_img, 1)))
    if N >= 2:
        cap = min(cap, N // 2)        # >= 2 grid steps so both v7x TCs get work
    best, best_key = 1, (-1, -1)
    for nb_c in range(1, cap + 1):    # prefer rows=nb*H aligned to the MXU M tile
        if N % nb_c:
            continue
        rows = nb_c * H
        align = 2 if rows % 256 == 0 else (1 if rows % 128 == 0 else 0)
        if (align, nb_c) > best_key:
            best_key, best = (align, nb_c), nb_c
    nb = best

    est = 2 * weight_bytes + nb * per_img + (1 << 20)
    vmem_limit = int(min(100 * 1024 * 1024,
                         max(32 * 1024 * 1024, est + (est >> 1))))

    def const_spec(arr):
        nd = arr.ndim
        # TODO(synk): pipeline_mode=pl.Buffered(1) would halve the VMEM for these
        # grid-invariant weights; left at the default for lowering safety.
        return pl.BlockSpec(arr.shape, lambda n, nd=nd: (0,) * nd)

    in_specs = [pl.BlockSpec((nb, H, w_cin), lambda n: (n, 0, 0))]
    in_specs += [const_spec(a) for a in inputs[1:]]

    kernel = functools.partial(
        _mobilev2_kernel, H=H, W=W, cin=cin, hidden=hidden, oup=oup,
        dilation=dilation, expand=expand, use_res=use_res, g1=g1, g2=g2)

    out_lane = pl.pallas_call(
        kernel,
        out_shape=jax.ShapeDtypeStruct((N, H, w_oup), x_nchw.dtype),
        grid_spec=pltpu.PrefetchScalarGridSpec(
            num_scalar_prefetch=0,
            grid=(N // nb,),
            in_specs=in_specs,
            out_specs=pl.BlockSpec((nb, H, w_oup), lambda n: (n, 0, 0)),
            scratch_shapes=[
                pltpu.VMEM((nb, H + 2 * pad, w_hid), jnp.float32)]),
        compiler_params=pltpu.CompilerParams(
            dimension_semantics=("parallel",),
            vmem_limit_bytes=vmem_limit),
    )(*inputs)

    return jnp.transpose(out_lane.reshape(N, H, W, oup), (0, 3, 1, 2))


# ---------------- deterministic synthetic parameters ----------------
def make_params(key, inp, oup, expanse_ratio):
    hidden = int(inp * expanse_ratio)
    ks = jax.random.split(key, 6)

    def bn(k, c):
        k1, k2, k3, k4 = jax.random.split(k, 4)
        gamma = jax.random.uniform(k1, (c,), jnp.float32, 0.5, 1.5)
        beta = 0.1 * jax.random.normal(k2, (c,), jnp.float32)
        mean = 0.1 * jax.random.normal(k3, (c,), jnp.float32)
        var = jax.random.uniform(k4, (c,), jnp.float32, 0.5, 1.5)
        return gamma, beta, mean, var

    p = {}
    if expanse_ratio != 1:
        p["w1"] = 0.2 * jax.random.normal(ks[0], (hidden, inp, 1, 1), jnp.float32)
        p["bn1"] = bn(ks[1], hidden)
    p["wdw"] = 0.2 * jax.random.normal(ks[2], (hidden, 1, 3, 3), jnp.float32)
    p["bn2"] = bn(ks[3], hidden)
    p["w3"] = 0.2 * jax.random.normal(ks[4], (oup, hidden, 1, 1), jnp.float32)
    p["bn3"] = bn(ks[5], oup)
    return p


# ---------------- pure-JAX reference (for correctness check) ----------------
def reference(x, params, *, stride=1, expanse_ratio=2, dilation=1):
    N, cin, H, W = x.shape
    hidden = int(cin * expanse_ratio)
    oup = params["w3"].shape[0]
    use_res = (stride == 1) and (cin == oup)

    def bn_apply(y, bnp):
        gamma, beta, mean, var = bnp
        scale = gamma / jnp.sqrt(var + 1e-5)
        shift = beta - mean * scale
        return y * scale[None, :, None, None] + shift[None, :, None, None]

    h = x
    if expanse_ratio != 1:
        h = jax.lax.conv_general_dilated(
            h, params["w1"], (1, 1), "VALID",
            dimension_numbers=("NCHW", "OIHW", "NCHW"))
        h = jnp.clip(bn_apply(h, params["bn1"]), 0.0, 6.0)
    h = jax.lax.conv_general_dilated(
        h, params["wdw"], (stride, stride),
        [(dilation, dilation), (dilation, dilation)],
        rhs_dilation=(dilation, dilation),
        dimension_numbers=("NCHW", "OIHW", "NCHW"),
        feature_group_count=hidden)
    h = jnp.clip(bn_apply(h, params["bn2"]), 0.0, 6.0)
    h = jax.lax.conv_general_dilated(
        h, params["w3"], (1, 1), "VALID",
        dimension_numbers=("NCHW", "OIHW", "NCHW"))
    h = bn_apply(h, params["bn3"])
    return x + h if use_res else h


if __name__ == "__main__":
    key = jax.random.PRNGKey(0)

    configs = [
        # (N, inp, H, W, oup, expanse_ratio, dilation)
        (2, 8, 16, 32, 8, 2, 1),   # expand path; 2 lane groups per 1x1 conv
        (2, 8, 16, 16, 8, 1, 1),   # expanse_ratio == 1 path (no expand conv)
    ]
    for (N, inp, H, W, oup, er, dil) in configs:
        kx, kp, key = jax.random.split(key, 3)
        x = jax.random.normal(kx, (N, inp, H, W), jnp.float32)
        params = make_params(kp, inp, oup, er)

        y = mobilev2_residual(x, params, stride=1,
                              expanse_ratio=er, dilation=dil)
        y = jax.block_until_ready(y)

        y_ref = reference(x, params, stride=1, expanse_ratio=er, dilation=dil)
        assert y.shape == (N, oup, H, W)
        # Tolerance accounts for bf16 MXU operands in the expand/project matmuls.
        np.testing.assert_allclose(np.asarray(y), np.asarray(y_ref),
                                   atol=8e-2, rtol=5e-2)
    print("KERNEL_OK")
</pallas_src>

<mosaic_0001>
module attributes {stable_mosaic.version = 11 : i64} {
  func.func @_mobilev2_kernel(%arg0: i32, %arg1: memref<1x16x256xf32, #tpu.memory_space<vmem>>, %arg2: memref<128x256xbf16, #tpu.memory_space<vmem>>, %arg3: memref<1x512xf32, #tpu.memory_space<vmem>>, %arg4: memref<9x512xf32, #tpu.memory_space<vmem>>, %arg5: memref<1x512xf32, #tpu.memory_space<vmem>>, %arg6: memref<256x128xbf16, #tpu.memory_space<vmem>>, %arg7: memref<1x256xf32, #tpu.memory_space<vmem>>, %arg8: memref<1x16x256xf32, #tpu.memory_space<vmem>>, %arg9: memref<1x18x512xf32, #tpu.memory_space<vmem>>) attributes {dimension_semantics = [#tpu.dimension_semantics<parallel>], iteration_bounds = array<i64: 2>, scalar_prefetch = 0 : i64, scratch_operands = 1 : i64, tpu.core_type = #tpu.core_type<tc>, window_params = [{transform_indices = @transform_0, window_bounds = array<i64: 1, 16, 256>}, {pipeline_mode = #tpu.pipeline_mode<synchronous>, transform_indices = @transform_1, window_bounds = array<i64: 128, 256>}, {pipeline_mode = #tpu.pipeline_mode<synchronous>, transform_indices = @transform_2, window_bounds = array<i64: 1, 512>}, {pipeline_mode = #tpu.pipeline_mode<synchronous>, transform_indices = @transform_3, window_bounds = array<i64: 9, 512>}, {pipeline_mode = #tpu.pipeline_mode<synchronous>, transform_indices = @transform_4, window_bounds = array<i64: 1, 512>}, {pipeline_mode = #tpu.pipeline_mode<synchronous>, transform_indices = @transform_5, window_bounds = array<i64: 256, 128>}, {pipeline_mode = #tpu.pipeline_mode<synchronous>, transform_indices = @transform_6, window_bounds = array<i64: 1, 256>}, {transform_indices = @transform_7, window_bounds = array<i64: 1, 16, 256>}]} {
    %cst = arith.constant 0.000000e+00 : f32
    %0 = vector.broadcast %cst : f32 to vector<1x1x512xf32>
    %c0 = arith.constant 0 : index
    %c0_0 = arith.constant 0 : index
    %c0_1 = arith.constant 0 : index
    %1 = vector.load %arg9[%c0, %c0_0, %c0_1] : memref<1x18x512xf32, #tpu.memory_space<vmem>>, vector<1x1x512xf32>
    tpu.vector_store %arg9[%c0, %c0_0, %c0_1], %0 {strides = array<i32>} : memref<1x18x512xf32, #tpu.memory_space<vmem>>, vector<1x1x512xf32>,
    %cst_2 = arith.constant 0.000000e+00 : f32
    %2 = vector.broadcast %cst_2 : f32 to vector<1x1x512xf32>
    %c0_3 = arith.constant 0 : index
    %c17 = arith.constant 17 : index
    %c0_4 = arith.constant 0 : index
    %3 = vector.load %arg9[%c0_3, %c17, %c0_4] : memref<1x18x512xf32, #tpu.memory_space<vmem>>, vector<1x1x512xf32>
    tpu.vector_store %arg9[%c0_3, %c17, %c0_4], %2 {strides = array<i32>} : memref<1x18x512xf32, #tpu.memory_space<vmem>>, vector<1x1x512xf32>,
    %c0_5 = arith.constant 0 : index
    %c0_6 = arith.constant 0 : index
    %c0_7 = arith.constant 0 : index
    %4 = vector.load %arg1[%c0_5, %c0_6, %c0_7] : memref<1x16x256xf32, #tpu.memory_space<vmem>>, vector<1x16x128xf32>
    %5 = vector.shape_cast %4 : vector<1x16x128xf32> to vector<16x128xf32>
    %6 = arith.truncf %5 : vector<16x128xf32> to vector<16x128xbf16>
    %c0_8 = arith.constant 0 : index
    %c0_9 = arith.constant 0 : index
    %7 = vector.load %arg2[%c0_8, %c0_9] : memref<128x256xbf16, #tpu.memory_space<vmem>>, vector<128x256xbf16>
    %cst_10 = arith.constant dense<0.000000e+00> : vector<16x256xf32>
    %8 = tpu.matmul %6, %7, %cst_10 {dimension_numbers = #tpu.dot_dimension_numbers<[1], [0], [0], [1], [0, 0, 1, 1], [], []>} : vector<16x128xbf16>, vector<128x256xbf16>, vector<16x256xf32> -> vector<16x256xf32>
    %c0_11 = arith.constant 0 : index
    %c0_12 = arith.constant 0 : index
    %9 = vector.load %arg3[%c0_11, %c0_12] : memref<1x512xf32, #tpu.memory_space<vmem>>, vector<1x256xf32>
    %10 = vector.broadcast %9 : vector<1x256xf32> to vector<16x256xf32>
    %11 = arith.addf %8, %10 : vector<16x256xf32>
    %cst_13 = arith.constant 0.000000e+00 : f32
    %cst_14 = arith.constant 6.000000e+00 : f32
    %12 = vector.broadcast %cst_13 : f32 to vector<16x256xf32>
    %13 = arith.maximumf %12, %11 : vector<16x256xf32>
    %14 = vector.broadcast %cst_14 : f32 to vector<16x256xf32>
    %15 = arith.minimumf %14, %13 : vector<16x256xf32>
    %16 = vector.shape_cast %15 : vector<16x256xf32> to vector<1x16x256xf32>
    %c0_15 = arith.constant 0 : index
    %c1 = arith.constant 1 : index
    %c0_16 = arith.constant 0 : index
    %17 = vector.load %arg9[%c0_15, %c1, %c0_16] : memref<1x18x512xf32, #tpu.memory_space<vmem>>, vector<1x16x256xf32>
    tpu.vector_store %arg9[%c0_15, %c1, %c0_16], %16 {strides = array<i32>} : memref<1x18x512xf32, #tpu.memory_space<vmem>>, vector<1x16x256xf32>,
    %c0_17 = arith.constant 0 : index
    %c0_18 = arith.constant 0 : index
    %c128 = arith.constant 128 : index
    %18 = vector.load %arg1[%c0_17, %c0_18, %c128] : memref<1x16x256xf32, #tpu.memory_space<vmem>>, vector<1x16x128xf32>
    %19 = vector.shape_cast %18 : vector<1x16x128xf32> to vector<16x128xf32>
    %20 = arith.truncf %19 : vector<16x128xf32> to vector<16x128xbf16>
    %c0_19 = arith.constant 0 : index
    %c0_20 = arith.constant 0 : index
    %21 = vector.load %arg2[%c0_19, %c0_20] : memref<128x256xbf16, #tpu.memory_space<vmem>>, vector<128x256xbf16>
    %cst_21 = arith.constant dense<0.000000e+00> : vector<16x256xf32>
    %22 = tpu.matmul %20, %21, %cst_21 {dimension_numbers = #tpu.dot_dimension_numbers<[1], [0], [0], [1], [0, 0, 1, 1], [], []>} : vector<16x128xbf16>, vector<128x256xbf16>, vector<16x256xf32> -> vector<16x256xf32>
    %c0_22 = arith.constant 0 : index
    %c256 = arith.constant 256 : index
    %23 = vector.load %arg3[%c0_22, %c256] : memref<1x512xf32, #tpu.memory_space<vmem>>, vector<1x256xf32>
    %24 = vector.broadcast %23 : vector<1x256xf32> to vector<16x256xf32>
    %25 = arith.addf %22, %24 : vector<16x256xf32>
    %cst_23 = arith.constant 0.000000e+00 : f32
    %cst_24 = arith.constant 6.000000e+00 : f32
    %26 = vector.broadcast %cst_23 : f32 to vector<16x256xf32>
    %27 = arith.maximumf %26, %25 : vector<16x256xf32>
    %28 = vector.broadcast %cst_24 : f32 to vector<16x256xf32>
    %29 = arith.minimumf %28, %27 : vector<16x256xf32>
    %30 = vector.shape_cast %29 : vector<16x256xf32> to vector<1x16x256xf32>
    %c0_25 = arith.constant 0 : index
    %c1_26 = arith.constant 1 : index
    %c256_27 = arith.constant 256 : index
    %31 = vector.load %arg9[%c0_25, %c1_26, %c256_27] : memref<1x18x512xf32, #tpu.memory_space<vmem>>, vector<1x16x256xf32>
    tpu.vector_store %arg9[%c0_25, %c1_26, %c256_27], %30 {strides = array<i32>} : memref<1x18x512xf32, #tpu.memory_space<vmem>>, vector<1x16x256xf32>,
    %cst_28 = arith.constant 0.000000e+00 : f32
    %32 = vector.broadcast %cst_28 : f32 to vector<16x512xf32>
    %c0_29 = arith.constant 0 : index
    %c0_30 = arith.constant 0 : index
    %c0_31 = arith.constant 0 : index
    %33 = vector.load %arg9[%c0_29, %c0_30, %c0_31] : memref<1x18x512xf32, #tpu.memory_space<vmem>>, vector<1x16x512xf32>
    %34 = vector.shape_cast %33 : vector<1x16x512xf32> to vector<16x512xf32>
    %c16_i32 = arith.constant 16 : i32
    %35 = tpu.dynamic_rotate %34 by %c16_i32 dim 1 : vector<16x512xf32>, i32 -> vector<16x512xf32>
    %c496_i32 = arith.constant 496 : i32
    %36 = tpu.dynamic_rotate %34 by %c496_i32 dim 1 : vector<16x512xf32>, i32 -> vector<16x512xf32>
    %c0_32 = arith.constant 0 : index
    %c0_33 = arith.constant 0 : index
    %37 = vector.load %arg4[%c0_32, %c0_33] : memref<9x512xf32, #tpu.memory_space<vmem>>, vector<1x512xf32>
    %38 = vector.broadcast %37 : vector<1x512xf32> to vector<16x512xf32>
    %39 = arith.mulf %35, %38 : vector<16x512xf32>
    %40 = arith.addf %32, %39 : vector<16x512xf32>
    %c1_34 = arith.constant 1 : index
    %c0_35 = arith.constant 0 : index
    %41 = vector.load %arg4[%c1_34, %c0_35] : memref<9x512xf32, #tpu.memory_space<vmem>>, vector<1x512xf32>
    %42 = vector.broadcast %41 : vector<1x512xf32> to vector<16x512xf32>
    %43 = arith.mulf %34, %42 : vector<16x512xf32>
    %44 = arith.addf %40, %43 : vector<16x512xf32>
    %c2 = arith.constant 2 : index
    %c0_36 = arith.constant 0 : index
    %45 = vector.load %arg4[%c2, %c0_36] : memref<9x512xf32, #tpu.memory_space<vmem>>, vector<1x512xf32>
    %46 = vector.broadcast %45 : vector<1x512xf32> to vector<16x512xf32>
    %47 = arith.mulf %36, %46 : vector<16x512xf32>
    %48 = arith.addf %44, %47 : vector<16x512xf32>
    %c0_37 = arith.constant 0 : index
    %c1_38 = arith.constant 1 : index
    %c0_39 = arith.constant 0 : index
    %49 = vector.load %arg9[%c0_37, %c1_38, %c0_39] : memref<1x18x512xf32, #tpu.memory_space<vmem>>, vector<1x16x512xf32>
    %50 = vector.shape_cast %49 : vector<1x16x512xf32> to vector<16x512xf32>
    %c16_i32_40 = arith.constant 16 : i32
    %51 = tpu.dynamic_rotate %50 by %c16_i32_40 dim 1 : vector<16x512xf32>, i32 -> vector<16x512xf32>
    %c496_i32_41 = arith.constant 496 : i32
    %52 = tpu.dynamic_rotate %50 by %c496_i32_41 dim 1 : vector<16x512xf32>, i32 -> vector<16x512xf32>
    %c3 = arith.constant 3 : index
    %c0_42 = arith.constant 0 : index
    %53 = vector.load %arg4[%c3, %c0_42] : memref<9x512xf32, #tpu.memory_space<vmem>>, vector<1x512xf32>
    %54 = vector.broadcast %53 : vector<1x512xf32> to vector<16x512xf32>
    %55 = arith.mulf %51, %54 : vector<16x512xf32>
    %56 = arith.addf %48, %55 : vector<16x512xf32>
    %c4 = arith.constant 4 : index
    %c0_43 = arith.constant 0 : index
    %57 = vector.load %arg4[%c4, %c0_43] : memref<9x512xf32, #tpu.memory_space<vmem>>, vector<1x512xf32>
    %58 = vector.broadcast %57 : vector<1x512xf32> to vector<16x512xf32>
    %59 = arith.mulf %50, %58 : vector<16x512xf32>
    %60 = arith.addf %56, %59 : vector<16x512xf32>
    %c5 = arith.constant 5 : index
    %c0_44 = arith.constant 0 : index
    %61 = vector.load %arg4[%c5, %c0_44] : memref<9x512xf32, #tpu.memory_space<vmem>>, vector<1x512xf32>
    %62 = vector.broadcast %61 : vector<1x512xf32> to vector<16x512xf32>
    %63 = arith.mulf %52, %62 : vector<16x512xf32>
    %64 = arith.addf %60, %63 : vector<16x512xf32>
    %c0_45 = arith.constant 0 : index
    %c2_46 = arith.constant 2 : index
    %c0_47 = arith.constant 0 : index
    %65 = vector.load %arg9[%c0_45, %c2_46, %c0_47] : memref<1x18x512xf32, #tpu.memory_space<vmem>>, vector<1x16x512xf32>
    %66 = vector.shape_cast %65 : vector<1x16x512xf32> to vector<16x512xf32>
    %c16_i32_48 = arith.constant 16 : i32
    %67 = tpu.dynamic_rotate %66 by %c16_i32_48 dim 1 : vector<16x512xf32>, i32 -> vector<16x512xf32>
    %c496_i32_49 = arith.constant 496 : i32
    %68 = tpu.dynamic_rotate %66 by %c496_i32_49 dim 1 : vector<16x512xf32>, i32 -> vector<16x512xf32>
    %c6 = arith.constant 6 : index
    %c0_50 = arith.constant 0 : index
    %69 = vector.load %arg4[%c6, %c0_50] : memref<9x512xf32, #tpu.memory_space<vmem>>, vector<1x512xf32>
    %70 = vector.broadcast %69 : vector<1x512xf32> to vector<16x512xf32>
    %71 = arith.mulf %67, %70 : vector<16x512xf32>
    %72 = arith.addf %64, %71 : vector<16x512xf32>
    %c7 = arith.constant 7 : index
    %c0_51 = arith.constant 0 : index
    %73 = vector.load %arg4[%c7, %c0_51] : memref<9x512xf32, #tpu.memory_space<vmem>>, vector<1x512xf32>
    %74 = vector.broadcast %73 : vector<1x512xf32> to vector<16x512xf32>
    %75 = arith.mulf %66, %74 : vector<16x512xf32>
    %76 = arith.addf %72, %75 : vector<16x512xf32>
    %c8 = arith.constant 8 : index
    %c0_52 = arith.constant 0 : index
    %77 = vector.load %arg4[%c8, %c0_52] : memref<9x512xf32, #tpu.memory_space<vmem>>, vector<1x512xf32>
    %78 = vector.broadcast %77 : vector<1x512xf32> to vector<16x512xf32>
    %79 = arith.mulf %68, %78 : vector<16x512xf32>
    %80 = arith.addf %76, %79 : vector<16x512xf32>
    %c0_53 = arith.constant 0 : index
    %c0_54 = arith.constant 0 : index
    %81 = vector.load %arg5[%c0_53, %c0_54] : memref<1x512xf32, #tpu.memory_space<vmem>>, vector<1x512xf32>
    %82 = vector.broadcast %81 : vector<1x512xf32> to vector<16x512xf32>
    %83 = arith.addf %80, %82 : vector<16x512xf32>
    %cst_55 = arith.constant 0.000000e+00 : f32
    %cst_56 = arith.constant 6.000000e+00 : f32
    %84 = vector.broadcast %cst_55 : f32 to vector<16x512xf32>
    %85 = arith.maximumf %84, %83 : vector<16x512xf32>
    %86 = vector.broadcast %cst_56 : f32 to vector<16x512xf32>
    %87 = arith.minimumf %86, %85 : vector<16x512xf32>
    %88 = vector.extract_strided_slice %87 {offsets = [0, 0], sizes = [16, 256], strides = [1, 1]} : vector<16x512xf32> to vector<16x256xf32>
    %89 = arith.truncf %88 : vector<16x256xf32> to vector<16x256xbf16>
    %c0_57 = arith.constant 0 : index
    %c0_58 = arith.constant 0 : index
    %90 = vector.load %arg6[%c0_57, %c0_58] : memref<256x128xbf16, #tpu.memory_space<vmem>>, vector<256x128xbf16>
    %cst_59 = arith.constant dense<0.000000e+00> : vector<16x128xf32>
    %91 = tpu.matmul %89, %90, %cst_59 {dimension_numbers = #tpu.dot_dimension_numbers<[1], [0], [0], [1], [0, 0, 1, 1], [], []>} : vector<16x256xbf16>, vector<256x128xbf16>, vector<16x128xf32> -> vector<16x128xf32>
    %c0_60 = arith.constant 0 : index
    %c0_61 = arith.constant 0 : index
    %92 = vector.load %arg7[%c0_60, %c0_61] : memref<1x256xf32, #tpu.memory_space<vmem>>, vector<1x128xf32>
    %93 = vector.broadcast %92 : vector<1x128xf32> to vector<16x128xf32>
    %94 = arith.addf %91, %93 : vector<16x128xf32>
    %c0_62 = arith.constant 0 : index
    %c0_63 = arith.constant 0 : index
    %c0_64 = arith.constant 0 : index
    %95 = vector.load %arg1[%c0_62, %c0_63, %c0_64] : memref<1x16x256xf32, #tpu.memory_space<vmem>>, vector<1x16x128xf32>
    %96 = vector.shape_cast %95 : vector<1x16x128xf32> to vector<16x128xf32>
    %97 = arith.addf %94, %96 : vector<16x128xf32>
    %98 = vector.shape_cast %97 : vector<16x128xf32> to vector<1x16x128xf32>
    %c0_65 = arith.constant 0 : index
    %c0_66 = arith.constant 0 : index
    %c0_67 = arith.constant 0 : index
    %99 = vector.load %arg8[%c0_65, %c0_66, %c0_67] : memref<1x16x256xf32, #tpu.memory_space<vmem>>, vector<1x16x128xf32>
    tpu.vector_store %arg8[%c0_65, %c0_66, %c0_67], %98 {strides = array<i32>} : memref<1x16x256xf32, #tpu.memory_space<vmem>>, vector<1x16x128xf32>,
    %100 = vector.extract_strided_slice %87 {offsets = [0, 256], sizes = [16, 256], strides = [1, 1]} : vector<16x512xf32> to vector<16x256xf32>
    %101 = arith.truncf %100 : vector<16x256xf32> to vector<16x256xbf16>
    %c0_68 = arith.constant 0 : index
    %c0_69 = arith.constant 0 : index
    %102 = vector.load %arg6[%c0_68, %c0_69] : memref<256x128xbf16, #tpu.memory_space<vmem>>, vector<256x128xbf16>
    %cst_70 = arith.constant dense<0.000000e+00> : vector<16x128xf32>
    %103 = tpu.matmul %101, %102, %cst_70 {dimension_numbers = #tpu.dot_dimension_numbers<[1], [0], [0], [1], [0, 0, 1, 1], [], []>} : vector<16x256xbf16>, vector<256x128xbf16>, vector<16x128xf32> -> vector<16x128xf32>
    %c0_71 = arith.constant 0 : index
    %c128_72 = arith.constant 128 : index
    %104 = vector.load %arg7[%c0_71, %c128_72] : memref<1x256xf32, #tpu.memory_space<vmem>>, vector<1x128xf32>
    %105 = vector.broadcast %104 : vector<1x128xf32> to vector<16x128xf32>
    %106 = arith.addf %103, %105 : vector<16x128xf32>
    %c0_73 = arith.constant 0 : index
    %c0_74 = arith.constant 0 : index
    %c128_75 = arith.constant 128 : index
    %107 = vector.load %arg1[%c0_73, %c0_74, %c128_75] : memref<1x16x256xf32, #tpu.memory_space<vmem>>, vector<1x16x128xf32>
    %108 = vector.shape_cast %107 : vector<1x16x128xf32> to vector<16x128xf32>
    %109 = arith.addf %106, %108 : vector<16x128xf32>
    %110 = vector.shape_cast %109 : vector<16x128xf32> to vector<1x16x128xf32>
    %c0_76 = arith.constant 0 : index
    %c0_77 = arith.constant 0 : index
    %c128_78 = arith.constant 128 : index
    %111 = vector.load %arg8[%c0_76, %c0_77, %c128_78] : memref<1x16x256xf32, #tpu.memory_space<vmem>>, vector<1x16x128xf32>
    tpu.vector_store %arg8[%c0_76, %c0_77, %c128_78], %110 {strides = array<i32>} : memref<1x16x256xf32, #tpu.memory_space<vmem>>, vector<1x16x128xf32>,
    return
  }
  func.func @transform_0(%arg0: i32) -> (i32, i32, i32) {
    %c0_i32 = arith.constant 0 : i32
    %c0_i32_0 = arith.constant 0 : i32
    %c0_i32_1 = arith.constant 0 : i32
    return %arg0, %c0_i32, %c0_i32_0 : i32, i32, i32
  }
  func.func @transform_1(%arg0: i32) -> (i32, i32) {
    %c0_i32 = arith.constant 0 : i32
    %c0_i32_0 = arith.constant 0 : i32
    %c0_i32_1 = arith.constant 0 : i32
    return %c0_i32, %c0_i32_0 : i32, i32
  }
  func.func @transform_2(%arg0: i32) -> (i32, i32) {
    %c0_i32 = arith.constant 0 : i32
    %c0_i32_0 = arith.constant 0 : i32
    %c0_i32_1 = arith.constant 0 : i32
    return %c0_i32, %c0_i32_0 : i32, i32
  }
  func.func @transform_3(%arg0: i32) -> (i32, i32) {
    %c0_i32 = arith.constant 0 : i32
    %c0_i32_0 = arith.constant 0 : i32
    %c0_i32_1 = arith.constant 0 : i32
    return %c0_i32, %c0_i32_0 : i32, i32
  }
  func.func @transform_4(%arg0: i32) -> (i32, i32) {
    %c0_i32 = arith.constant 0 : i32
    %c0_i32_0 = arith.constant 0 : i32
    %c0_i32_1 = arith.constant 0 : i32
    return %c0_i32, %c0_i32_0 : i32, i32
  }
  func.func @transform_5(%arg0: i32) -> (i32, i32) {
    %c0_i32 = arith.constant 0 : i32
    %c0_i32_0 = arith.constant 0 : i32
    %c0_i32_1 = arith.constant 0 : i32
    return %c0_i32, %c0_i32_0 : i32, i32
  }
  func.func @transform_6(%arg0: i32) -> (i32, i32) {
    %c0_i32 = arith.constant 0 : i32
    %c0_i32_0 = arith.constant 0 : i32
    %c0_i32_1 = arith.constant 0 : i32
    return %c0_i32, %c0_i32_0 : i32, i32
  }
  func.func @transform_7(%arg0: i32) -> (i32, i32, i32) {
    %c0_i32 = arith.constant 0 : i32
    %c0_i32_0 = arith.constant 0 : i32
    %c0_i32_1 = arith.constant 0 : i32
    return %arg0, %c0_i32, %c0_i32_0 : i32, i32, i32
  }
}

</mosaic_0001>

<llo_original>
// kernel: tpu_custom_call.1
$region0: #{tpu_custom_call.1}
  #allocation0 [shape = 'u32[]', space=smem, size = 0x4, offset = 0x4, fixed_abs, tag = 'smem constant byte address 0x4 - core index']
  #allocation1 [shape = 'u32[144,128]{1,0:T(1,128)}', space=vmem, size = 0x12000, scoped, tag = 'internal scratch']
  #allocation2 [shape = 'f32[1,18,512]{2,1,0:T(8,128)}', space=vmem, size = 0xc000, scoped, tag = 'scratch operand']
  %s0 = inlined_call_operand.hbm [shape: f32[2,16,256], index: 0, kind: input, shape index: {}]
  %s1 = inlined_call_operand.hbm [shape: bf16[128,256], index: 1, kind: input, shape index: {}]
  %s2 = inlined_call_operand.hbm [shape: f32[1,512], index: 2, kind: input, shape index: {}]
  %s3 = inlined_call_operand.hbm [shape: f32[9,512], index: 3, kind: input, shape index: {}]
  %s4 = inlined_call_operand.vmem [shape: f32[1,512], index: 4, kind: input, shape index: {}]
  %s5 = inlined_call_operand.hbm [shape: bf16[256,128], index: 5, kind: input, shape index: {}]
  %s6 = inlined_call_operand.vmem [shape: f32[1,256], index: 6, kind: input, shape index: {}]
  %s7 = inlined_call_operand.hbm [shape: f32[2,16,256], index: 7, kind: output, shape index: {}]
  %s8 = sld [smem:[#allocation0]]
  $region81: #{tpu_custom_call.1} parent=0
    _
  %s10 = ssub.s32 1, %s8
  %s11 = scalar_select 0, %s10, %s8
  $region1: #{tpu_custom_call.1} parent=0
    #allocation3 [shape = 'u8[32768]{0}', space=vmem, size = 0x8000, scoped, tag = 'input window, operand 0']
    #allocation4 [shape = 's32[2]{0}', space=sflag, size = 0x8, scoped, tag = 'scoped memory for tpu_custom_call.1']
    #allocation5 [shape = 's32[2]{0}', space=sflag, size = 0x8, scoped, tag = 'scoped memory for tpu_custom_call.1']
    #allocation6 [shape = 'u8[65536]{0}', space=vmem, size = 0x10000, scoped, tag = 'input window, operand 1, single buffered']
    #allocation7 [shape = 's32[1]{0}', space=sflag, size = 0x4, scoped, tag = 'scoped memory for tpu_custom_call.1']
    #allocation8 [shape = 'u8[2048]{0}', space=vmem, size = 0x800, scoped, tag = 'input window, operand 2, single buffered']
    #allocation9 [shape = 'u8[32768]{0}', space=vmem, size = 0x8000, scoped, tag = 'input window, operand 3, single buffered']
    #allocation10 [shape = 's32[1]{0}', space=sflag, size = 0x4, scoped, tag = 'scoped memory for tpu_custom_call.1']
    #allocation11 [shape = 'u8[65536]{0}', space=vmem, size = 0x10000, scoped, tag = 'input window, operand 5, single buffered']
    #allocation12 [shape = 'u8[32768]{0}', space=vmem, size = 0x8000, scoped, tag = 'output window, operand 0']
    %12 = vsyncpa [#allocation4], 0
    %s13 = scalar_lea.sflag [#allocation4], 1
    %14 = vsyncpa %s13, 0
    %15 = vsyncpa [#allocation7], 0
    %16 = vsyncpa [#allocation10], 0
    %17 = vsyncpa [#allocation5], 0
    %s18 = scalar_lea.sflag [#allocation5], 1
    %19 = vsyncpa %s18, 0
    loop: start=0, step=1, limit=4
    $region2: #{tpu_custom_call.1} parent=1 // loop_pre_header
      _
    $region3: #{tpu_custom_call.1} parent=1 // loop_header
      %s21 = sphi 0, %s25
      %p22 = scmp.ge.s32.totalorder %s21, 4
      %s31 = sphi 0, %s33
      %s34 = sphi 0, %s31
      %s35 = sphi 0, %s34
      %s51 = sphi 0, %s35
      %s55 = sphi 0, %s55
      %s57 = sphi 0, %s55
      %s58 = sphi 0, %s57
      %s72 = sphi 0, %s58
      %s76 = sphi 0, %s76
      %s78 = sphi 0, %s76
      %s79 = sphi 0, %s78
      %s93 = sphi 0, %s79
      %s97 = sphi 0, %s97
      %s99 = sphi 0, %s97
      %s100 = sphi 0, %s99
      %s114 = sphi 0, %s100
      %s118 = sphi 0, %s118
      %s120 = sphi 0, %s118
      %s121 = sphi 0, %s120
      %s135 = sphi 0, %s121
      %s139 = sphi 0, %s139
      %s141 = sphi 0, %s139
      %s142 = sphi 0, %s141
      %s156 = sphi 0, %s142
      %s160 = sphi 0, %s160
      %s162 = sphi 0, %s160
      %s163 = sphi 0, %s162
      %s177 = sphi 0, %s163
      %s183 = sphi 0, %s185
      %s186 = sphi 0, %s183
      %s187 = sphi 0, %s186
      %s203 = sphi 0, %s187
    $region4: #{tpu_custom_call.1} parent=1 // loop_header_branch
      %24 = sbr.rel (%p22) target = $region8
    $region5: #{tpu_custom_call.1} parent=1 // loop_body
      %s26 = ssub.s32 %s21, 1
      %s27 = ssub.s32 %s21, 2
      %s28 = sadd.s32 %s21, 1
      %s29 = ssub.s32 %s21, %s28
      %p30 = scmp.eq.s32.totalorder %s29, 0
      %s32 = sadd.s32 %s31, 1
      %s33 = scalar_select %p30, %s31, %s32
      %p36 = pneg %p30
      %p37 = scmp.eq.s32.totalorder %s21, 1
      %p38 = por %p36, %p37
      %p39 = scmp.ne.s32.totalorder %s31, %s34
      %p40 = scmp.eq.s32.totalorder %s21, 0
      %p41 = por %p39, %p40
      %p42 = scmp.ne.s32.totalorder %s31, %s34
      %p43 = scmp.eq.s32.totalorder %s26, 1
      %p44 = por %p42, %p43
      %p45 = scmp.ne.s32.totalorder %s34, %s35
      %p46 = scmp.eq.s32.totalorder %s26, 0
      %p47 = por %p45, %p46
      %p48 = scmp.ne.s32.totalorder %s34, %s35
      %p49 = scmp.eq.s32.totalorder %s27, 1
      %p50 = por %p48, %p49
      %p52 = scmp.ne.s32.totalorder %s35, %s51
      %p53 = scmp.eq.s32.totalorder %s27, 0
      %p54 = por %p52, %p53
      %s56 = sadd.s32 %s55, 1
      %p59 = scmp.eq.s32.totalorder %s21, 1
      %p60 = scmp.ne.s32.totalorder %s55, %s57
      %p61 = scmp.eq.s32.totalorder %s21, 0
      %p62 = por %p60, %p61
      %p63 = scmp.ne.s32.totalorder %s55, %s57
      %p64 = scmp.eq.s32.totalorder %s26, 1
      %p65 = por %p63, %p64
      %p66 = scmp.ne.s32.totalorder %s57, %s58
      %p67 = scmp.eq.s32.totalorder %s26, 0
      %p68 = por %p66, %p67
      %p69 = scmp.ne.s32.totalorder %s57, %s58
      %p70 = scmp.eq.s32.totalorder %s27, 1
      %p71 = por %p69, %p70
      %p73 = scmp.ne.s32.totalorder %s58, %s72
      %p74 = scmp.eq.s32.totalorder %s27, 0
      %p75 = por %p73, %p74
      %s77 = sadd.s32 %s76, 1
      %p80 = scmp.eq.s32.totalorder %s21, 1
      %p81 = scmp.ne.s32.totalorder %s76, %s78
      %p82 = scmp.eq.s32.totalorder %s21, 0
      %p83 = por %p81, %p82
      %p84 = scmp.ne.s32.totalorder %s76, %s78
      %p85 = scmp.eq.s32.totalorder %s26, 1
      %p86 = por %p84, %p85
      %p87 = scmp.ne.s32.totalorder %s78, %s79
      %p88 = scmp.eq.s32.totalorder %s26, 0
      %p89 = por %p87, %p88
      %p90 = scmp.ne.s32.totalorder %s78, %s79
      %p91 = scmp.eq.s32.totalorder %s27, 1
      %p92 = por %p90, %p91
      %p94 = scmp.ne.s32.totalorder %s79, %s93
      %p95 = scmp.eq.s32.totalorder %s27, 0
      %p96 = por %p94, %p95
      %s98 = sadd.s32 %s97, 1
      %p101 = scmp.eq.s32.totalorder %s21, 1
      %p102 = scmp.ne.s32.totalorder %s97, %s99
      %p103 = scmp.eq.s32.totalorder %s21, 0
      %p104 = por %p102, %p103
      %p105 = scmp.ne.s32.totalorder %s97, %s99
      %p106 = scmp.eq.s32.totalorder %s26, 1
      %p107 = por %p105, %p106
      %p108 = scmp.ne.s32.totalorder %s99, %s100
      %p109 = scmp.eq.s32.totalorder %s26, 0
      %p110 = por %p108, %p109
      %p111 = scmp.ne.s32.totalorder %s99, %s100
      %p112 = scmp.eq.s32.totalorder %s27, 1
      %p113 = por %p111, %p112
      %p115 = scmp.ne.s32.totalorder %s100, %s114
      %p116 = scmp.eq.s32.totalorder %s27, 0
      %p117 = por %p115, %p116
      %s119 = sadd.s32 %s118, 1
      %p122 = scmp.eq.s32.totalorder %s21, 1
      %p123 = scmp.ne.s32.totalorder %s118, %s120
      %p124 = scmp.eq.s32.totalorder %s21, 0
      %p125 = por %p123, %p124
      %p126 = scmp.ne.s32.totalorder %s118, %s120
      %p127 = scmp.eq.s32.totalorder %s26, 1
      %p128 = por %p126, %p127
      %p129 = scmp.ne.s32.totalorder %s120, %s121
      %p130 = scmp.eq.s32.totalorder %s26, 0
      %p131 = por %p129, %p130
      %p132 = scmp.ne.s32.totalorder %s120, %s121
      %p133 = scmp.eq.s32.totalorder %s27, 1
      %p134 = por %p132, %p133
      %p136 = scmp.ne.s32.totalorder %s121, %s135
      %p137 = scmp.eq.s32.totalorder %s27, 0
      %p138 = por %p136, %p137
      %s140 = sadd.s32 %s139, 1
      %p143 = scmp.eq.s32.totalorder %s21, 1
      %p144 = scmp.ne.s32.totalorder %s139, %s141
      %p145 = scmp.eq.s32.totalorder %s21, 0
      %p146 = por %p144, %p145
      %p147 = scmp.ne.s32.totalorder %s139, %s141
      %p148 = scmp.eq.s32.totalorder %s26, 1
      %p149 = por %p147, %p148
      %p150 = scmp.ne.s32.totalorder %s141, %s142
      %p151 = scmp.eq.s32.totalorder %s26, 0
      %p152 = por %p150, %p151
      %p153 = scmp.ne.s32.totalorder %s141, %s142
      %p154 = scmp.eq.s32.totalorder %s27, 1
      %p155 = por %p153, %p154
      %p157 = scmp.ne.s32.totalorder %s142, %s156
      %p158 = scmp.eq.s32.totalorder %s27, 0
      %p159 = por %p157, %p158
      %s161 = sadd.s32 %s160, 1
      %p164 = scmp.eq.s32.totalorder %s21, 1
      %p165 = scmp.ne.s32.totalorder %s160, %s162
      %p166 = scmp.eq.s32.totalorder %s21, 0
      %p167 = por %p165, %p166
      %p168 = scmp.ne.s32.totalorder %s160, %s162
      %p169 = scmp.eq.s32.totalorder %s26, 1
      %p170 = por %p168, %p169
      %p171 = scmp.ne.s32.totalorder %s162, %s163
      %p172 = scmp.eq.s32.totalorder %s26, 0
      %p173 = por %p171, %p172
      %p174 = scmp.ne.s32.totalorder %s162, %s163
      %p175 = scmp.eq.s32.totalorder %s27, 1
      %p176 = por %p174, %p175
      %p178 = scmp.ne.s32.totalorder %s163, %s177
      %p179 = scmp.eq.s32.totalorder %s27, 0
      %p180 = por %p178, %p179
      %s181 = ssub.s32 %s21, %s28
      %p182 = scmp.eq.s32.totalorder %s181, 0
      %s184 = sadd.s32 %s183, 1
      %s185 = scalar_select %p182, %s183, %s184
      %p188 = pneg %p182
      %p189 = scmp.eq.s32.totalorder %s21, 1
      %p190 = por %p188, %p189
      %p191 = scmp.ne.s32.totalorder %s183, %s186
      %p192 = scmp.eq.s32.totalorder %s21, 0
      %p193 = por %p191, %p192
      %p194 = scmp.ne.s32.totalorder %s183, %s186
      %p195 = scmp.eq.s32.totalorder %s26, 1
      %p196 = por %p194, %p195
      %p197 = scmp.ne.s32.totalorder %s186, %s187
      %p198 = scmp.eq.s32.totalorder %s26, 0
      %p199 = por %p197, %p198
      %p200 = scmp.ne.s32.totalorder %s186, %s187
      %p201 = scmp.eq.s32.totalorder %s27, 1
      %p202 = por %p200, %p201
      %p204 = scmp.ne.s32.totalorder %s187, %s203
      %p205 = scmp.eq.s32.totalorder %s27, 0
      %p206 = por %p204, %p205
      %p207 = scmp.le.s32.totalorder 1, %s21
      %p208 = scmp.lt.s32.totalorder %s21, 3
      %p209 = pnand %p207, %p208
      %p210 = pneg %p209
      // Predicated region
      $region9: #{tpu_custom_call.1} parent=5 // pred_check
        _
      $region10: #{tpu_custom_call.1} parent=5 // pred_check_branch
        %212 = sbr.rel (%p209) target = $region12
      $region11: #{tpu_custom_call.1} parent=5 // pred_region
        %s213 = ssub.s32 %s21, 1
        // Predicated region
        $region13: #{tpu_custom_call.1} parent=11 // pred_check
          %p214 = pneg %p68
        $region14: #{tpu_custom_call.1} parent=11 // pred_check_branch
          %216 = sbr.rel (%p214) target = $region16
        $region15: #{tpu_custom_call.1} parent=11 // pred_region
          %s218 = ssub.s32 2048, 2048
          %219 = vsyncadd [#allocation7], %s218
          %s220 = sshll.u32 [#allocation6], 4
          %s221 = int_to_ptr.vmem [resolvable:$true] %s220
          %226 = dma.hbm_to_vmem [thread:$0]  %s1, 2048, %s221, [#allocation7], 128, 128, 8
        $region16: #{tpu_custom_call.1} parent=11 // pred_fallthru
          _
        // Predicated region
        $region17: #{tpu_custom_call.1} parent=11 // pred_check
          %p227 = pneg %p89
        $region18: #{tpu_custom_call.1} parent=11 // pred_check_branch
          %229 = sbr.rel (%p227) target = $region20
        $region19: #{tpu_custom_call.1} parent=11 // pred_region
          %s231 = ssub.s32 64, 64
          %232 = vsyncadd [#allocation7], %s231
          %s234 = sshll.u32 [#allocation8], 4
          %s235 = int_to_ptr.vmem [resolvable:$true] %s234
          %237 = dma.hbm_to_vmem [thread:$0]  %s2, 64, %s235, [#allocation7]
        $region20: #{tpu_custom_call.1} parent=11 // pred_fallthru
          _
        // Predicated region
        $region21: #{tpu_custom_call.1} parent=11 // pred_check
          %p238 = pneg %p110
        $region22: #{tpu_custom_call.1} parent=11 // pred_check_branch
          %240 = sbr.rel (%p238) target = $region24
        $region23: #{tpu_custom_call.1} parent=11 // pred_region
          %s242 = ssub.s32 1024, 1024
          %243 = vsyncadd [#allocation10], %s242
          %s244 = sshll.u32 [#allocation9], 4
          %s245 = int_to_ptr.vmem [resolvable:$true] %s244
          %250 = dma.hbm_to_vmem [thread:$0]  %s3, 1024, %s245, [#allocation10], 512, 512, 32
        $region24: #{tpu_custom_call.1} parent=11 // pred_fallthru
          _
        // Predicated region
        $region25: #{tpu_custom_call.1} parent=11 // pred_check
          %p251 = pneg %p131
        $region26: #{tpu_custom_call.1} parent=11 // pred_check_branch
          %253 = sbr.rel (%p251) target = $region28
        $region27: #{tpu_custom_call.1} parent=11 // pred_region
          _
        $region28: #{tpu_custom_call.1} parent=11 // pred_fallthru
          _
        // Predicated region
        $region29: #{tpu_custom_call.1} parent=11 // pred_check
          %p254 = pneg %p152
        $region30: #{tpu_custom_call.1} parent=11 // pred_check_branch
          %256 = sbr.rel (%p254) target = $region32
        $region31: #{tpu_custom_call.1} parent=11 // pred_region
          %s258 = ssub.s32 2048, 2048
          %259 = vsyncadd [#allocation10], %s258
          %s260 = sshll.u32 [#allocation11], 4
          %s261 = int_to_ptr.vmem [resolvable:$true] %s260
          %266 = dma.hbm_to_vmem [thread:$0]  %s5, 2048, %s261, [#allocation10], 64, 64, 4
        $region32: #{tpu_custom_call.1} parent=11 // pred_fallthru
          _
        // Predicated region
        $region33: #{tpu_custom_call.1} parent=11 // pred_check
          %p267 = pneg %p173
        $region34: #{tpu_custom_call.1} parent=11 // pred_check_branch
          %269 = sbr.rel (%p267) target = $region36
        $region35: #{tpu_custom_call.1} parent=11 // pred_region
          _
        $region36: #{tpu_custom_call.1} parent=11 // pred_fallthru
          _
      $region12: #{tpu_custom_call.1} parent=5 // pred_fallthru
        _
      %p270 = scmp.lt.s32.totalorder %s21, 2
      // Predicated region
      $region37: #{tpu_custom_call.1} parent=5 // pred_check
        %p271 = pneg %p270
      $region38: #{tpu_custom_call.1} parent=5 // pred_check_branch
        %273 = sbr.rel (%p271) target = $region40
      $region39: #{tpu_custom_call.1} parent=5 // pred_region
        // Predicated region
        $region41: #{tpu_custom_call.1} parent=39 // pred_check
          %p274 = pneg %p41
        $region42: #{tpu_custom_call.1} parent=39 // pred_check_branch
          %276 = sbr.rel (%p274) target = $region44
        $region43: #{tpu_custom_call.1} parent=39 // pred_region
          %s277 = sand.u32 %s31, 1
          %s278 = scalar_lea.sflag [#allocation4], %s277
          %s279 = sand.u32 %s31, 1
          %s280 = smul.addr %s279, 32
          %s281 = scalar_lea.vmem [#allocation3], %s280
          %s283 = ssub.s32 512, 512
          %284 = vsyncadd %s278, %s283
          %s285 = smul.addr %s21, 4
          %s286 = smul.addr %s285, 128
          %s287 = scalar_lea.hbm %s0, %s286
          %s288 = sshll.u32 %s281, 4
          %s289 = int_to_ptr.vmem [resolvable:$true] %s288
          %294 = dma.hbm_to_vmem [thread:$0]  %s287, 512, %s289, %s278, 256, 256, 16
        $region44: #{tpu_custom_call.1} parent=39 // pred_fallthru
          _
      $region40: #{tpu_custom_call.1} parent=5 // pred_fallthru
        _
      %p295 = scmp.le.s32.totalorder 1, %s21
      %p296 = scmp.lt.s32.totalorder %s21, 3
      %p297 = pnand %p295, %p296
      %p298 = pneg %p297
      // Predicated region
      $region45: #{tpu_custom_call.1} parent=5 // pred_check
        _
      $region46: #{tpu_custom_call.1} parent=5 // pred_check_branch
        %300 = sbr.rel (%p297) target = $region48
      $region47: #{tpu_custom_call.1} parent=5 // pred_region
        %s301 = ssub.s32 %s21, 1
        %s302 = sand.u32 %s34, 1
        %s303 = scalar_lea.sflag [#allocation4], %s302
        %s304 = sand.u32 %s34, 1
        %s305 = smul.addr %s304, 32
        %s306 = scalar_lea.vmem [#allocation3], %s305
        // Predicated region
        $region49: #{tpu_custom_call.1} parent=47 // pred_check
          %p307 = pneg %p47
        $region50: #{tpu_custom_call.1} parent=47 // pred_check_branch
          %309 = sbr.rel (%p307) target = $region52
        $region51: #{tpu_custom_call.1} parent=47 // pred_region
          %310 = dma.done %s303, 512
        $region52: #{tpu_custom_call.1} parent=47 // pred_fallthru
          _
        // Predicated region
        $region53: #{tpu_custom_call.1} parent=47 // pred_check
          %p311 = pneg %p68
        $region54: #{tpu_custom_call.1} parent=47 // pred_check_branch
          %313 = sbr.rel (%p311) target = $region56
        $region55: #{tpu_custom_call.1} parent=47 // pred_region
          %314 = dma.done [#allocation7], 2048
        $region56: #{tpu_custom_call.1} parent=47 // pred_fallthru
          _
        // Predicated region
        $region57: #{tpu_custom_call.1} parent=47 // pred_check
          %p315 = pneg %p89
        $region58: #{tpu_custom_call.1} parent=47 // pred_check_branch
          %317 = sbr.rel (%p315) target = $region60
        $region59: #{tpu_custom_call.1} parent=47 // pred_region
          %318 = dma.done [#allocation7], 64
        $region60: #{tpu_custom_call.1} parent=47 // pred_fallthru
          _
        // Predicated region
        $region61: #{tpu_custom_call.1} parent=47 // pred_check
          %p319 = pneg %p110
        $region62: #{tpu_custom_call.1} parent=47 // pred_check_branch
          %321 = sbr.rel (%p319) target = $region64
        $region63: #{tpu_custom_call.1} parent=47 // pred_region
          %322 = dma.done [#allocation10], 1024
        $region64: #{tpu_custom_call.1} parent=47 // pred_fallthru
          _
        // Predicated region
        $region65: #{tpu_custom_call.1} parent=47 // pred_check
          %p323 = pneg %p152
        $region66: #{tpu_custom_call.1} parent=47 // pred_check_branch
          %325 = sbr.rel (%p323) target = $region68
        $region67: #{tpu_custom_call.1} parent=47 // pred_region
          %326 = dma.done [#allocation10], 2048
        $region68: #{tpu_custom_call.1} parent=47 // pred_fallthru
          _
        %s327 = sand.u32 %s34, 1
        %s328 = scalar_lea.sflag [#allocation4], %s327
        %s329 = sand.u32 %s34, 1
        %s330 = smul.addr %s329, 32
        %s331 = scalar_lea.vmem [#allocation3], %s330
        %p332 = pneg %p47
        %p333 = pneg %p44
        %p334 = pneg %p68
        %p335 = pneg %p65
        %p336 = pneg %p89
        %p337 = pneg %p86
        %p338 = pneg %p110
        %p339 = pneg %p107
        %p340 = pneg %p131
        %p341 = pneg %p128
        %p342 = pneg %p152
        %p343 = pneg %p149
        %p344 = pneg %p173
        %p345 = pneg %p170
        %p346 = pneg %p199
        %p347 = pneg %p196
        %s348 = sand.u32 %s186, 1
        %s349 = scalar_lea.sflag [#allocation5], %s348
        %s350 = sand.u32 %s186, 1
        %s351 = smul.addr %s350, 32
        %s352 = scalar_lea.vmem [#allocation12], %s351
        %v354 = vlaneseq
        %vm355 = vcmp.ge.s32.totalorder %v354, 0
        %vm356 = vcmp.lt.s32.totalorder %v354, 512
        %vm357 = vmand %vm355, %vm356
        %358 = vst.msk [vmem:[#allocation2] ss:$8 sm:$0xf] %vm357, 0.0
        %359 = vst.msk [vmem:[#allocation2] ss:$8 sm:$0x0] %vm357, 0.0
        %s360 = scalar_lea.vmem [#allocation2], 65
        %361 = vst.msk [vmem:[%s360] ss:$8 sm:$0xf] %vm357, 0.0
        %362 = vst.msk [vmem:[%s360] ss:$8 sm:$0x0] %vm357, 0.0
        %v363 = vld [vmem:[%s306] sm:$0xff]
        %v364 = vld [vmem:[%s306 + $0x10] sm:$0xff]
        %v365 = vpack.c.bf16 %v364, %v363
        %v366 = vld [vmem:[#allocation6] sm:$0xff]
        %v367 = vld [vmem:[#allocation6 + $0x8] sm:$0xff]
        %v368 = vld [vmem:[#allocation6 + $0x10] sm:$0xff]
        %v369 = vld [vmem:[#allocation6 + $0x18] sm:$0xff]
        %v370 = vld [vmem:[#allocation6 + $0x20] sm:$0xff]
        %v371 = vld [vmem:[#allocation6 + $0x28] sm:$0xff]
        %v372 = vld [vmem:[#allocation6 + $0x30] sm:$0xff]
        %v373 = vld [vmem:[#allocation6 + $0x38] sm:$0xff]
        %v374 = vld [vmem:[#allocation6 + $0x40] sm:$0xff]
        %v375 = vld [vmem:[#allocation6 + $0x48] sm:$0xff]
        %v376 = vld [vmem:[#allocation6 + $0x50] sm:$0xff]
        %v377 = vld [vmem:[#allocation6 + $0x58] sm:$0xff]
        %v378 = vld [vmem:[#allocation6 + $0x60] sm:$0xff]
        %v379 = vld [vmem:[#allocation6 + $0x68] sm:$0xff]
        %v380 = vld [vmem:[#allocation6 + $0x70] sm:$0xff]
        %v381 = vld [vmem:[#allocation6 + $0x78] sm:$0xff]
        %v382 = vld [vmem:[#allocation8] sm:$0x3]
        %v384 = vlaneseq
        %v385 = vshrl.u32 %v384, 7
        %v386 = vsub.s32 0, %v385
        %v387 = vrot.slane %v382, %v386
        %v388 = vlaneseq
        %v389 = vshrl.u32 %v388, 7
        %v390 = vsub.s32 1, %v389
        %v391 = vrot.slane %v382, %v390
        %v410 = vunpack.c.l.b16 %v366
        %v411 = vunpack.c.h.b16 %v366
        %v412 = vunpack.c.l.b16 %v367
        %v413 = vunpack.c.h.b16 %v367
        %v414 = vunpack.c.l.b16 %v368
        %v415 = vunpack.c.h.b16 %v368
        %v416 = vunpack.c.l.b16 %v369
        %v417 = vunpack.c.h.b16 %v369
        %v418 = vunpack.c.l.b16 %v370
        %v419 = vunpack.c.h.b16 %v370
        %v420 = vunpack.c.l.b16 %v371
        %v421 = vunpack.c.h.b16 %v371
        %v422 = vunpack.c.l.b16 %v372
        %v423 = vunpack.c.h.b16 %v372
        %v424 = vunpack.c.l.b16 %v373
        %v425 = vunpack.c.h.b16 %v373
        %v426 = vunpack.c.l.b16 %v374
        %v427 = vunpack.c.h.b16 %v374
        %v428 = vunpack.c.l.b16 %v375
        %v429 = vunpack.c.h.b16 %v375
        %v430 = vunpack.c.l.b16 %v376
        %v431 = vunpack.c.h.b16 %v376
        %v432 = vunpack.c.l.b16 %v377
        %v433 = vunpack.c.h.b16 %v377
        %v434 = vunpack.c.l.b16 %v378
        %v435 = vunpack.c.h.b16 %v378
        %v436 = vunpack.c.l.b16 %v379
        %v437 = vunpack.c.h.b16 %v379
        %v438 = vunpack.c.l.b16 %v380
        %v439 = vunpack.c.h.b16 %v380
        %v440 = vunpack.c.l.b16 %v381
        %v441 = vunpack.c.h.b16 %v381
        %v442 = vpack.c.b16 %v412, %v410
        %v443 = vpack.c.b16 %v413, %v411
        %v444 = vpack.c.b16 %v416, %v414
        %v445 = vpack.c.b16 %v417, %v415
        %v446 = vpack.c.b16 %v420, %v418
        %v447 = vpack.c.b16 %v421, %v419
        %v448 = vpack.c.b16 %v424, %v422
        %v449 = vpack.c.b16 %v425, %v423
        %v450 = vpack.c.b16 %v428, %v426
        %v451 = vpack.c.b16 %v429, %v427
        %v452 = vpack.c.b16 %v432, %v430
        %v453 = vpack.c.b16 %v433, %v431
        %v454 = vpack.c.b16 %v436, %v434
        %v455 = vpack.c.b16 %v437, %v435
        %v456 = vpack.c.b16 %v440, %v438
        %v457 = vpack.c.b16 %v441, %v439
        %474 = vmatprep.subr.bf16.mxu0 %v457
        %475 = vmatpush1.bf16.msra.mxu0 %v456
        %476 = vmatprep.subr.bf16.mxu0 %v455
        %477 = vmatpush1.bf16.msra.mxu0 %v454
        %478 = vmatprep.subr.bf16.mxu0 %v453
        %479 = vmatpush1.bf16.msra.mxu0 %v452
        %480 = vmatprep.subr.bf16.mxu0 %v451
        %481 = vmatpush1.bf16.msra.mxu0 %v450
        %482 = vmatprep.subr.bf16.mxu0 %v449
        %483 = vmatpush1.bf16.msra.mxu0 %v448
        %484 = vmatprep.subr.bf16.mxu0 %v447
        %485 = vmatpush1.bf16.msra.mxu0 %v446
        %486 = vmatprep.subr.bf16.mxu0 %v445
        %487 = vmatpush1.bf16.msra.mxu0 %v444
        %488 = vmatprep.subr.bf16.mxu0 %v443
        %489 = vmatpush1.bf16.msra.mxu0 %v442
        %490 = vmatprep.subr.bf16.mxu0 0
        %491 = vmatpush2.bf16.msra.mxu0 0
        %492 = vmatprep.subr.bf16.mxu0 0
        %493 = vmatpush2.bf16.msra.mxu0 0
        %494 = vmatprep.subr.bf16.mxu0 0
        %495 = vmatpush2.bf16.msra.mxu0 0
        %496 = vmatprep.subr.bf16.mxu0 0
        %497 = vmatpush2.bf16.msra.mxu0 0
        %498 = vmatprep.subr.bf16.mxu0 0
        %499 = vmatpush2.bf16.msra.mxu0 0
        %500 = vmatprep.subr.bf16.mxu0 0
        %501 = vmatpush2.bf16.msra.mxu0 0
        %502 = vmatprep.subr.bf16.mxu0 0
        %503 = vmatpush2.bf16.msra.mxu0 0
        %504 = vmatprep.subr.bf16.mxu0 0
        %505 = vmatpush2.bf16.msra.mxu0 0
        %506 = vmatprep.mubr.bf16.mxu0 0
        %507 = vmatmul.mubr.bf16.gmra.mxu0 %v365
        %v508 = vpop.f32.mrf.mxu0
        %v509 = vadd.f32 %v387, %v508
        %v510 = vpop.f32.mrf.mxu0
        %v511 = vadd.f32 %v391, %v510
        %v512 = vpop.f32.mrf.mxu0
        %v513 = vadd.f32 %v387, %v512
        %v514 = vpop.f32.mrf.mxu0
        %v515 = vadd.f32 %v391, %v514
        %516 = vdwg.mxu0
        %v517 = vmax.f32 %v509, 0.0
        %v518 = vmax.f32 %v511, 0.0
        %v519 = vmax.f32 %v513, 0.0
        %v520 = vmax.f32 %v515, 0.0
        %v521 = vmin.f32 %v517, 6.0
        %v522 = vmin.f32 %v518, 6.0
        %v523 = vmin.f32 %v519, 6.0
        %v524 = vmin.f32 %v520, 6.0
        %vm529 = vcmask 1040384
        %v530 = vrot.slane %v521, 7
        %v531 = vrot.slane %v522, 7
        %v532 = vrot.slane %v523, 7
        %v533 = vsel %vm529, %v530, %v532
        %v534 = vrot.slane %v524, 7
        %v535 = vsel %vm529, %v531, %v534
        %542 = vst [vmem:[#allocation2] sm:$0xfe] %v530
        %543 = vst [vmem:[#allocation2 + $0x8] sm:$0xfe] %v531
        %544 = vst [vmem:[#allocation2 + $0x20] sm:$0xff] %v533
        %545 = vst [vmem:[#allocation2 + $0x28] sm:$0xff] %v535
        %546 = vst [vmem:[#allocation2 + $0x40] sm:$0x1] %v532
        %547 = vst [vmem:[#allocation2 + $0x48] sm:$0x1] %v534
        %v548 = vld [vmem:[%s306 + $0x8] sm:$0xff]
        %v549 = vld [vmem:[%s306 + $0x18] sm:$0xff]
        %v550 = vpack.c.bf16 %v549, %v548
        %v551 = vld [vmem:[#allocation6] sm:$0xff]
        %v552 = vld [vmem:[#allocation6 + $0x8] sm:$0xff]
        %v553 = vld [vmem:[#allocation6 + $0x10] sm:$0xff]
        %v554 = vld [vmem:[#allocation6 + $0x18] sm:$0xff]
        %v555 = vld [vmem:[#allocation6 + $0x20] sm:$0xff]
        %v556 = vld [vmem:[#allocation6 + $0x28] sm:$0xff]
        %v557 = vld [vmem:[#allocation6 + $0x30] sm:$0xff]
        %v558 = vld [vmem:[#allocation6 + $0x38] sm:$0xff]
        %v559 = vld [vmem:[#allocation6 + $0x40] sm:$0xff]
        %v560 = vld [vmem:[#allocation6 + $0x48] sm:$0xff]
        %v561 = vld [vmem:[#allocation6 + $0x50] sm:$0xff]
        %v562 = vld [vmem:[#allocation6 + $0x58] sm:$0xff]
        %v563 = vld [vmem:[#allocation6 + $0x60] sm:$0xff]
        %v564 = vld [vmem:[#allocation6 + $0x68] sm:$0xff]
        %v565 = vld [vmem:[#allocation6 + $0x70] sm:$0xff]
        %v566 = vld [vmem:[#allocation6 + $0x78] sm:$0xff]
        %v567 = vld [vmem:[#allocation8 + $0x2] sm:$0x3]
        %v569 = vlaneseq
        %v570 = vshrl.u32 %v569, 7
        %v571 = vsub.s32 0, %v570
        %v572 = vrot.slane %v567, %v571
        %v573 = vlaneseq
        %v574 = vshrl.u32 %v573, 7
        %v575 = vsub.s32 1, %v574
        %v576 = vrot.slane %v567, %v575
        %v595 = vunpack.c.l.b16 %v551
        %v596 = vunpack.c.h.b16 %v551
        %v597 = vunpack.c.l.b16 %v552
        %v598 = vunpack.c.h.b16 %v552
        %v599 = vunpack.c.l.b16 %v553
        %v600 = vunpack.c.h.b16 %v553
        %v601 = vunpack.c.l.b16 %v554
        %v602 = vunpack.c.h.b16 %v554
        %v603 = vunpack.c.l.b16 %v555
        %v604 = vunpack.c.h.b16 %v555
        %v605 = vunpack.c.l.b16 %v556
        %v606 = vunpack.c.h.b16 %v556
        %v607 = vunpack.c.l.b16 %v557
        %v608 = vunpack.c.h.b16 %v557
        %v609 = vunpack.c.l.b16 %v558
        %v610 = vunpack.c.h.b16 %v558
        %v611 = vunpack.c.l.b16 %v559
        %v612 = vunpack.c.h.b16 %v559
        %v613 = vunpack.c.l.b16 %v560
        %v614 = vunpack.c.h.b16 %v560
        %v615 = vunpack.c.l.b16 %v561
        %v616 = vunpack.c.h.b16 %v561
        %v617 = vunpack.c.l.b16 %v562
        %v618 = vunpack.c.h.b16 %v562
        %v619 = vunpack.c.l.b16 %v563
        %v620 = vunpack.c.h.b16 %v563
        %v621 = vunpack.c.l.b16 %v564
        %v622 = vunpack.c.h.b16 %v564
        %v623 = vunpack.c.l.b16 %v565
        %v624 = vunpack.c.h.b16 %v565
        %v625 = vunpack.c.l.b16 %v566
        %v626 = vunpack.c.h.b16 %v566
        %v627 = vpack.c.b16 %v597, %v595
        %v628 = vpack.c.b16 %v598, %v596
        %v629 = vpack.c.b16 %v601, %v599
        %v630 = vpack.c.b16 %v602, %v600
        %v631 = vpack.c.b16 %v605, %v603
        %v632 = vpack.c.b16 %v606, %v604
        %v633 = vpack.c.b16 %v609, %v607
        %v634 = vpack.c.b16 %v610, %v608
        %v635 = vpack.c.b16 %v613, %v611
        %v636 = vpack.c.b16 %v614, %v612
        %v637 = vpack.c.b16 %v617, %v615
        %v638 = vpack.c.b16 %v618, %v616
        %v639 = vpack.c.b16 %v621, %v619
        %v640 = vpack.c.b16 %v622, %v620
        %v641 = vpack.c.b16 %v625, %v623
        %v642 = vpack.c.b16 %v626, %v624
        %659 = vmatprep.subr.bf16.mxu0 %v642
        %660 = vmatpush1.bf16.msra.mxu0 %v641
        %661 = vmatprep.subr.bf16.mxu0 %v640
        %662 = vmatpush1.bf16.msra.mxu0 %v639
        %663 = vmatprep.subr.bf16.mxu0 %v638
        %664 = vmatpush1.bf16.msra.mxu0 %v637
        %665 = vmatprep.subr.bf16.mxu0 %v636
        %666 = vmatpush1.bf16.msra.mxu0 %v635
        %667 = vmatprep.subr.bf16.mxu0 %v634
        %668 = vmatpush1.bf16.msra.mxu0 %v633
        %669 = vmatprep.subr.bf16.mxu0 %v632
        %670 = vmatpush1.bf16.msra.mxu0 %v631
        %671 = vmatprep.subr.bf16.mxu0 %v630
        %672 = vmatpush1.bf16.msra.mxu0 %v629
        %673 = vmatprep.subr.bf16.mxu0 %v628
        %674 = vmatpush1.bf16.msra.mxu0 %v627
        %675 = vmatprep.subr.bf16.mxu0 0
        %676 = vmatpush2.bf16.msra.mxu0 0
        %677 = vmatprep.subr.bf16.mxu0 0
        %678 = vmatpush2.bf16.msra.mxu0 0
        %679 = vmatprep.subr.bf16.mxu0 0
        %680 = vmatpush2.bf16.msra.mxu0 0
        %681 = vmatprep.subr.bf16.mxu0 0
        %682 = vmatpush2.bf16.msra.mxu0 0
        %683 = vmatprep.subr.bf16.mxu0 0
        %684 = vmatpush2.bf16.msra.mxu0 0
        %685 = vmatprep.subr.bf16.mxu0 0
        %686 = vmatpush2.bf16.msra.mxu0 0
        %687 = vmatprep.subr.bf16.mxu0 0
        %688 = vmatpush2.bf16.msra.mxu0 0
        %689 = vmatprep.subr.bf16.mxu0 0
        %690 = vmatpush2.bf16.msra.mxu0 0
        %691 = vmatprep.mubr.bf16.mxu0 0
        %692 = vmatmul.mubr.bf16.gmra.mxu0 %v550
        %v693 = vpop.f32.mrf.mxu0
        %v694 = vadd.f32 %v572, %v693
        %v695 = vpop.f32.mrf.mxu0
        %v696 = vadd.f32 %v576, %v695
        %v697 = vpop.f32.mrf.mxu0
        %v698 = vadd.f32 %v572, %v697
        %v699 = vpop.f32.mrf.mxu0
        %v700 = vadd.f32 %v576, %v699
        %701 = vdwg.mxu0
        %v702 = vmax.f32 %v694, 0.0
        %v703 = vmax.f32 %v696, 0.0
        %v704 = vmax.f32 %v698, 0.0
        %v705 = vmax.f32 %v700, 0.0
        %v706 = vmin.f32 %v702, 6.0
        %v707 = vmin.f32 %v703, 6.0
        %v708 = vmin.f32 %v704, 6.0
        %v709 = vmin.f32 %v705, 6.0
        %v714 = vrot.slane %v706, 7
        %v715 = vrot.slane %v707, 7
        %v716 = vrot.slane %v708, 7
        %v717 = vsel %vm529, %v714, %v716
        %v718 = vrot.slane %v709, 7
        %v719 = vsel %vm529, %v715, %v718
        %726 = vst [vmem:[#allocation2 + $0x10] sm:$0xfe] %v714
        %727 = vst [vmem:[#allocation2 + $0x18] sm:$0xfe] %v715
        %728 = vst [vmem:[#allocation2 + $0x30] sm:$0xff] %v717
        %729 = vst [vmem:[#allocation2 + $0x38] sm:$0xff] %v719
        %730 = vst [vmem:[#allocation2 + $0x50] sm:$0x1] %v716
        %731 = vst [vmem:[#allocation2 + $0x58] sm:$0x1] %v718
        %v732 = vld [vmem:[#allocation2] sm:$0xff]
        %v733 = vld [vmem:[#allocation2 + $0x8] sm:$0xff]
        %v734 = vld [vmem:[#allocation2 + $0x10] sm:$0xff]
        %v735 = vld [vmem:[#allocation2 + $0x18] sm:$0xff]
        %v736 = vld [vmem:[#allocation2 + $0x20] sm:$0xff]
        %v737 = vld [vmem:[#allocation2 + $0x28] sm:$0xff]
        %v738 = vld [vmem:[#allocation2 + $0x30] sm:$0xff]
        %v739 = vld [vmem:[#allocation2 + $0x38] sm:$0xff]
        %740 = vrot.lane.b32.xlu0 %v732, 16
        %v741 = vpop.permute.xlu0 %740
        %742 = vrot.lane.b32.xlu0 %v736, 16
        %v743 = vpop.permute.xlu0 %742
        %744 = vrot.lane.b32.xlu0 %v733, 16
        %v745 = vpop.permute.xlu0 %744
        %746 = vrot.lane.b32.xlu0 %v737, 16
        %v747 = vpop.permute.xlu0 %746
        %748 = vrot.lane.b32.xlu0 %v734, 16
        %v749 = vpop.permute.xlu0 %748
        %750 = vrot.lane.b32.xlu0 %v738, 16
        %v751 = vpop.permute.xlu0 %750
        %752 = vrot.lane.b32.xlu0 %v735, 16
        %v753 = vpop.permute.xlu0 %752
        %754 = vrot.lane.b32.xlu0 %v739, 16
        %v755 = vpop.permute.xlu0 %754
        %v756 = vlaneseq
        %v757 = vand.u32 %v756, 127
        %vm758 = vcmp.lt.s32.totalorder %v757, 16
        %v759 = vsel %vm758, %v749, %v753
        %v760 = vsel %vm758, %v751, %v755
        %v761 = vsel %vm758, %v745, %v749
        %v762 = vsel %vm758, %v747, %v751
        %v763 = vsel %vm758, %v741, %v745
        %v764 = vsel %vm758, %v743, %v747
        %v765 = vsel %vm758, %v753, %v741
        %v766 = vsel %vm758, %v755, %v743
        %767 = vrot.lane.b32.xlu0 %v732, 112
        %v768 = vpop.permute.xlu0 %767
        %769 = vrot.lane.b32.xlu0 %v736, 112
        %v770 = vpop.permute.xlu0 %769
        %771 = vrot.lane.b32.xlu0 %v733, 112
        %v772 = vpop.permute.xlu0 %771
        %773 = vrot.lane.b32.xlu0 %v737, 112
        %v774 = vpop.permute.xlu0 %773
        %775 = vrot.lane.b32.xlu0 %v734, 112
        %v776 = vpop.permute.xlu0 %775
        %777 = vrot.lane.b32.xlu0 %v738, 112
        %v778 = vpop.permute.xlu0 %777
        %779 = vrot.lane.b32.xlu0 %v735, 112
        %v780 = vpop.permute.xlu0 %779
        %781 = vrot.lane.b32.xlu0 %v739, 112
        %v782 = vpop.permute.xlu0 %781
        %vm783 = vcmp.lt.s32.totalorder %v757, 112
        %v784 = vsel %vm783, %v776, %v780
        %v785 = vsel %vm783, %v778, %v782
        %v786 = vsel %vm783, %v772, %v776
        %v787 = vsel %vm783, %v774, %v778
        %v788 = vsel %vm783, %v768, %v772
        %v789 = vsel %vm783, %v770, %v774
        %v790 = vsel %vm783, %v780, %v768
        %v791 = vsel %vm783, %v782, %v770
        %v792 = vld [vmem:[#allocation9] ss:$8 sm:$0xf]
        %v794 = vlaneseq
        %v795 = vshrl.u32 %v794, 7
        %v796 = vsub.s32 0, %v795
        %v797 = vrot.slane %v792, %v796
        %v798 = vlaneseq
        %v799 = vshrl.u32 %v798, 7
        %v800 = vsub.s32 1, %v799
        %v801 = vrot.slane %v792, %v800
        %v802 = vlaneseq
        %v803 = vshrl.u32 %v802, 7
        %v804 = vsub.s32 2, %v803
        %v805 = vrot.slane %v792, %v804
        %v806 = vlaneseq
        %v807 = vshrl.u32 %v806, 7
        %v808 = vsub.s32 3, %v807
        %v809 = vrot.slane %v792, %v808
        %v814 = vmul.f32 %v765, %v797
        %v815 = vmul.f32 %v763, %v801
        %v816 = vmul.f32 %v761, %v805
        %v817 = vmul.f32 %v759, %v809
        %v818 = vmul.f32 %v766, %v797
        %v819 = vmul.f32 %v764, %v801
        %v820 = vmul.f32 %v762, %v805
        %v821 = vmul.f32 %v760, %v809
        %v822 = vadd.f32 %v814, 0.0
        %v823 = vadd.f32 %v815, 0.0
        %v824 = vadd.f32 %v816, 0.0
        %v825 = vadd.f32 %v817, 0.0
        %v826 = vadd.f32 %v818, 0.0
        %v827 = vadd.f32 %v819, 0.0
        %v828 = vadd.f32 %v820, 0.0
        %v829 = vadd.f32 %v821, 0.0
        %s830 = scalar_lea.vmem [#allocation9], 1
        %v831 = vld [vmem:[%s830] ss:$8 sm:$0xf]
        %v833 = vlaneseq
        %v834 = vshrl.u32 %v833, 7
        %v835 = vsub.s32 0, %v834
        %v836 = vrot.slane %v831, %v835
        %v837 = vlaneseq
        %v838 = vshrl.u32 %v837, 7
        %v839 = vsub.s32 1, %v838
        %v840 = vrot.slane %v831, %v839
        %v841 = vlaneseq
        %v842 = vshrl.u32 %v841, 7
        %v843 = vsub.s32 2, %v842
        %v844 = vrot.slane %v831, %v843
        %v845 = vlaneseq
        %v846 = vshrl.u32 %v845, 7
        %v847 = vsub.s32 3, %v846
        %v848 = vrot.slane %v831, %v847
        %v853 = vmul.f32 %v732, %v836
        %v854 = vmul.f32 %v733, %v840
        %v855 = vmul.f32 %v734, %v844
        %v856 = vmul.f32 %v735, %v848
        %v857 = vmul.f32 %v736, %v836
        %v858 = vmul.f32 %v737, %v840
        %v859 = vmul.f32 %v738, %v844
        %v860 = vmul.f32 %v739, %v848
        %v861 = vadd.f32 %v822, %v853
        %v862 = vadd.f32 %v823, %v854
        %v863 = vadd.f32 %v824, %v855
        %v864 = vadd.f32 %v825, %v856
        %v865 = vadd.f32 %v826, %v857
        %v866 = vadd.f32 %v827, %v858
        %v867 = vadd.f32 %v828, %v859
        %v868 = vadd.f32 %v829, %v860
        %s869 = scalar_lea.vmem [#allocation9], 2
        %v870 = vld [vmem:[%s869] ss:$8 sm:$0xf]
        %v872 = vlaneseq
        %v873 = vshrl.u32 %v872, 7
        %v874 = vsub.s32 0, %v873
        %v875 = vrot.slane %v870, %v874
        %v876 = vlaneseq
        %v877 = vshrl.u32 %v876, 7
        %v878 = vsub.s32 1, %v877
        %v879 = vrot.slane %v870, %v878
        %v880 = vlaneseq
        %v881 = vshrl.u32 %v880, 7
        %v882 = vsub.s32 2, %v881
        %v883 = vrot.slane %v870, %v882
        %v884 = vlaneseq
        %v885 = vshrl.u32 %v884, 7
        %v886 = vsub.s32 3, %v885
        %v887 = vrot.slane %v870, %v886
        %v892 = vmul.f32 %v788, %v875
        %v893 = vmul.f32 %v786, %v879
        %v894 = vmul.f32 %v784, %v883
        %v895 = vmul.f32 %v790, %v887
        %v896 = vmul.f32 %v789, %v875
        %v897 = vmul.f32 %v787, %v879
        %v898 = vmul.f32 %v785, %v883
        %v899 = vmul.f32 %v791, %v887
        %v900 = vadd.f32 %v861, %v892
        %v901 = vadd.f32 %v862, %v893
        %v902 = vadd.f32 %v863, %v894
        %v903 = vadd.f32 %v864, %v895
        %v904 = vadd.f32 %v865, %v896
        %v905 = vadd.f32 %v866, %v897
        %v906 = vadd.f32 %v867, %v898
        %v907 = vadd.f32 %v868, %v899
        %v908 = vld [vmem:[#allocation2] sm:$0xfe]
        %v909 = vld [vmem:[#allocation2 + $0x8] sm:$0xfe]
        %v910 = vld [vmem:[#allocation2 + $0x10] sm:$0xfe]
        %v911 = vld [vmem:[#allocation2 + $0x18] sm:$0xfe]
        %v912 = vld [vmem:[#allocation2 + $0x20] sm:$0xff]
        %v913 = vld [vmem:[#allocation2 + $0x28] sm:$0xff]
        %v914 = vld [vmem:[#allocation2 + $0x30] sm:$0xff]
        %v915 = vld [vmem:[#allocation2 + $0x38] sm:$0xff]
        %v916 = vld [vmem:[#allocation2 + $0x40] sm:$0x1]
        %v917 = vld [vmem:[#allocation2 + $0x48] sm:$0x1]
        %v918 = vld [vmem:[#allocation2 + $0x50] sm:$0x1]
        %v919 = vld [vmem:[#allocation2 + $0x58] sm:$0x1]
        %vm932 = vcmask 1046528
        %v933 = vrot.slane %v908, 1
        %v934 = vrot.slane %v912, 1
        %v935 = vsel %vm932, %v933, %v934
        %v936 = vrot.slane %v909, 1
        %v937 = vrot.slane %v913, 1
        %v938 = vsel %vm932, %v936, %v937
        %v939 = vrot.slane %v910, 1
        %v940 = vrot.slane %v914, 1
        %v941 = vsel %vm932, %v939, %v940
        %v942 = vrot.slane %v911, 1
        %v943 = vrot.slane %v915, 1
        %v944 = vsel %vm932, %v942, %v943
        %v945 = vrot.slane %v916, 1
        %v946 = vsel %vm932, %v934, %v945
        %v947 = vrot.slane %v917, 1
        %v948 = vsel %vm932, %v937, %v947
        %v949 = vrot.slane %v918, 1
        %v950 = vsel %vm932, %v940, %v949
        %v951 = vrot.slane %v919, 1
        %v952 = vsel %vm932, %v943, %v951
        %961 = vrot.lane.b32.xlu0 %v935, 16
        %v962 = vpop.permute.xlu0 %961
        %963 = vrot.lane.b32.xlu0 %v946, 16
        %v964 = vpop.permute.xlu0 %963
        %965 = vrot.lane.b32.xlu0 %v938, 16
        %v966 = vpop.permute.xlu0 %965
        %967 = vrot.lane.b32.xlu0 %v948, 16
        %v968 = vpop.permute.xlu0 %967
        %969 = vrot.lane.b32.xlu0 %v941, 16
        %v970 = vpop.permute.xlu0 %969
        %971 = vrot.lane.b32.xlu0 %v950, 16
        %v972 = vpop.permute.xlu0 %971
        %973 = vrot.lane.b32.xlu0 %v944, 16
        %v974 = vpop.permute.xlu0 %973
        %975 = vrot.lane.b32.xlu0 %v952, 16
        %v976 = vpop.permute.xlu0 %975
        %v977 = vsel %vm758, %v970, %v974
        %v978 = vsel %vm758, %v972, %v976
        %v979 = vsel %vm758, %v966, %v970
        %v980 = vsel %vm758, %v968, %v972
        %v981 = vsel %vm758, %v962, %v966
        %v982 = vsel %vm758, %v964, %v968
        %v983 = vsel %vm758, %v974, %v962
        %v984 = vsel %vm758, %v976, %v964
        %985 = vrot.lane.b32.xlu0 %v935, 112
        %v986 = vpop.permute.xlu0 %985
        %987 = vrot.lane.b32.xlu0 %v946, 112
        %v988 = vpop.permute.xlu0 %987
        %989 = vrot.lane.b32.xlu0 %v938, 112
        %v990 = vpop.permute.xlu0 %989
        %991 = vrot.lane.b32.xlu0 %v948, 112
        %v992 = vpop.permute.xlu0 %991
        %993 = vrot.lane.b32.xlu0 %v941, 112
        %v994 = vpop.permute.xlu0 %993
        %995 = vrot.lane.b32.xlu0 %v950, 112
        %v996 = vpop.permute.xlu0 %995
        %997 = vrot.lane.b32.xlu0 %v944, 112
        %v998 = vpop.permute.xlu0 %997
        %999 = vrot.lane.b32.xlu0 %v952, 112
        %v1000 = vpop.permute.xlu0 %999
        %v1001 = vsel %vm783, %v994, %v998
        %v1002 = vsel %vm783, %v996, %v1000
        %v1003 = vsel %vm783, %v990, %v994
        %v1004 = vsel %vm783, %v992, %v996
        %v1005 = vsel %vm783, %v986, %v990
        %v1006 = vsel %vm783, %v988, %v992
        %v1007 = vsel %vm783, %v998, %v986
        %v1008 = vsel %vm783, %v1000, %v988
        %s1009 = scalar_lea.vmem [#allocation9], 3
        %v1010 = vld [vmem:[%s1009] ss:$8 sm:$0xf]
        %v1012 = vlaneseq
        %v1013 = vshrl.u32 %v1012, 7
        %v1014 = vsub.s32 0, %v1013
        %v1015 = vrot.slane %v1010, %v1014
        %v1016 = vlaneseq
        %v1017 = vshrl.u32 %v1016, 7
        %v1018 = vsub.s32 1, %v1017
        %v1019 = vrot.slane %v1010, %v1018
        %v1020 = vlaneseq
        %v1021 = vshrl.u32 %v1020, 7
        %v1022 = vsub.s32 2, %v1021
        %v1023 = vrot.slane %v1010, %v1022
        %v1024 = vlaneseq
        %v1025 = vshrl.u32 %v1024, 7
        %v1026 = vsub.s32 3, %v1025
        %v1027 = vrot.slane %v1010, %v1026
        %v1032 = vmul.f32 %v983, %v1015
        %v1033 = vmul.f32 %v981, %v1019
        %v1034 = vmul.f32 %v979, %v1023
        %v1035 = vmul.f32 %v977, %v1027
        %v1036 = vmul.f32 %v984, %v1015
        %v1037 = vmul.f32 %v982, %v1019
        %v1038 = vmul.f32 %v980, %v1023
        %v1039 = vmul.f32 %v978, %v1027
        %v1040 = vadd.f32 %v900, %v1032
        %v1041 = vadd.f32 %v901, %v1033
        %v1042 = vadd.f32 %v902, %v1034
        %v1043 = vadd.f32 %v903, %v1035
        %v1044 = vadd.f32 %v904, %v1036
        %v1045 = vadd.f32 %v905, %v1037
        %v1046 = vadd.f32 %v906, %v1038
        %v1047 = vadd.f32 %v907, %v1039
        %s1048 = scalar_lea.vmem [#allocation9], 4
        %v1049 = vld [vmem:[%s1048] ss:$8 sm:$0xf]
        %v1051 = vlaneseq
        %v1052 = vshrl.u32 %v1051, 7
        %v1053 = vsub.s32 0, %v1052
        %v1054 = vrot.slane %v1049, %v1053
        %v1055 = vlaneseq
        %v1056 = vshrl.u32 %v1055, 7
        %v1057 = vsub.s32 1, %v1056
        %v1058 = vrot.slane %v1049, %v1057
        %v1059 = vlaneseq
        %v1060 = vshrl.u32 %v1059, 7
        %v1061 = vsub.s32 2, %v1060
        %v1062 = vrot.slane %v1049, %v1061
        %v1063 = vlaneseq
        %v1064 = vshrl.u32 %v1063, 7
        %v1065 = vsub.s32 3, %v1064
        %v1066 = vrot.slane %v1049, %v1065
        %v1071 = vmul.f32 %v908, %v1054
        %v1072 = vmul.f32 %v909, %v1058
        %v1073 = vmul.f32 %v910, %v1062
        %v1074 = vmul.f32 %v911, %v1066
        %v1075 = vmul.f32 %v912, %v1054
        %v1076 = vmul.f32 %v913, %v1058
        %v1077 = vmul.f32 %v914, %v1062
        %v1078 = vmul.f32 %v915, %v1066
        %v1079 = vmul.f32 %v916, %v1054
        %v1080 = vmul.f32 %v917, %v1058
        %v1081 = vmul.f32 %v918, %v1062
        %v1082 = vmul.f32 %v919, %v1066
        %v1095 = vrot.slane %v1071, 1
        %v1096 = vrot.slane %v1075, 1
        %v1097 = vsel %vm932, %v1095, %v1096
        %v1098 = vrot.slane %v1072, 1
        %v1099 = vrot.slane %v1076, 1
        %v1100 = vsel %vm932, %v1098, %v1099
        %v1101 = vrot.slane %v1073, 1
        %v1102 = vrot.slane %v1077, 1
        %v1103 = vsel %vm932, %v1101, %v1102
        %v1104 = vrot.slane %v1074, 1
        %v1105 = vrot.slane %v1078, 1
        %v1106 = vsel %vm932, %v1104, %v1105
        %v1107 = vrot.slane %v1079, 1
        %v1108 = vsel %vm932, %v1096, %v1107
        %v1109 = vrot.slane %v1080, 1
        %v1110 = vsel %vm932, %v1099, %v1109
        %v1111 = vrot.slane %v1081, 1
        %v1112 = vsel %vm932, %v1102, %v1111
        %v1113 = vrot.slane %v1082, 1
        %v1114 = vsel %vm932, %v1105, %v1113
        %v1123 = vadd.f32 %v1040, %v1097
        %v1124 = vadd.f32 %v1041, %v1100
        %v1125 = vadd.f32 %v1042, %v1103
        %v1126 = vadd.f32 %v1043, %v1106
        %v1127 = vadd.f32 %v1044, %v1108
        %v1128 = vadd.f32 %v1045, %v1110
        %v1129 = vadd.f32 %v1046, %v1112
        %v1130 = vadd.f32 %v1047, %v1114
        %s1131 = scalar_lea.vmem [#allocation9], 5
        %v1132 = vld [vmem:[%s1131] ss:$8 sm:$0xf]
        %v1134 = vlaneseq
        %v1135 = vshrl.u32 %v1134, 7
        %v1136 = vsub.s32 0, %v1135
        %v1137 = vrot.slane %v1132, %v1136
        %v1138 = vlaneseq
        %v1139 = vshrl.u32 %v1138, 7
        %v1140 = vsub.s32 1, %v1139
        %v1141 = vrot.slane %v1132, %v1140
        %v1142 = vlaneseq
        %v1143 = vshrl.u32 %v1142, 7
        %v1144 = vsub.s32 2, %v1143
        %v1145 = vrot.slane %v1132, %v1144
        %v1146 = vlaneseq
        %v1147 = vshrl.u32 %v1146, 7
        %v1148 = vsub.s32 3, %v1147
        %v1149 = vrot.slane %v1132, %v1148
        %v1154 = vmul.f32 %v1005, %v1137
        %v1155 = vmul.f32 %v1003, %v1141
        %v1156 = vmul.f32 %v1001, %v1145
        %v1157 = vmul.f32 %v1007, %v1149
        %v1158 = vmul.f32 %v1006, %v1137
        %v1159 = vmul.f32 %v1004, %v1141
        %v1160 = vmul.f32 %v1002, %v1145
        %v1161 = vmul.f32 %v1008, %v1149
        %v1162 = vadd.f32 %v1123, %v1154
        %v1163 = vadd.f32 %v1124, %v1155
        %v1164 = vadd.f32 %v1125, %v1156
        %v1165 = vadd.f32 %v1126, %v1157
        %v1166 = vadd.f32 %v1127, %v1158
        %v1167 = vadd.f32 %v1128, %v1159
        %v1168 = vadd.f32 %v1129, %v1160
        %v1169 = vadd.f32 %v1130, %v1161
        %v1170 = vld [vmem:[#allocation2] sm:$0xfc]
        %v1171 = vld [vmem:[#allocation2 + $0x8] sm:$0xfc]
        %v1172 = vld [vmem:[#allocation2 + $0x10] sm:$0xfc]
        %v1173 = vld [vmem:[#allocation2 + $0x18] sm:$0xfc]
        %v1174 = vld [vmem:[#allocation2 + $0x40] sm:$0x3]
        %v1175 = vld [vmem:[#allocation2 + $0x48] sm:$0x3]
        %v1176 = vld [vmem:[#allocation2 + $0x50] sm:$0x3]
        %v1177 = vld [vmem:[#allocation2 + $0x58] sm:$0x3]
        %vm1186 = vcmask 1045504
        %v1187 = vrot.slane %v1170, 2
        %v1188 = vrot.slane %v912, 2
        %v1189 = vsel %vm1186, %v1187, %v1188
        %v1190 = vrot.slane %v1171, 2
        %v1191 = vrot.slane %v913, 2
        %v1192 = vsel %vm1186, %v1190, %v1191
        %v1193 = vrot.slane %v1172, 2
        %v1194 = vrot.slane %v914, 2
        %v1195 = vsel %vm1186, %v1193, %v1194
        %v1196 = vrot.slane %v1173, 2
        %v1197 = vrot.slane %v915, 2
        %v1198 = vsel %vm1186, %v1196, %v1197
        %v1199 = vrot.slane %v1174, 2
        %v1200 = vsel %vm1186, %v1188, %v1199
        %v1201 = vrot.slane %v1175, 2
        %v1202 = vsel %vm1186, %v1191, %v1201
        %v1203 = vrot.slane %v1176, 2
        %v1204 = vsel %vm1186, %v1194, %v1203
        %v1205 = vrot.slane %v1177, 2
        %v1206 = vsel %vm1186, %v1197, %v1205
        %1215 = vrot.lane.b32.xlu0 %v1189, 16
        %v1216 = vpop.permute.xlu0 %1215
        %1217 = vrot.lane.b32.xlu0 %v1200, 16
        %v1218 = vpop.permute.xlu0 %1217
        %1219 = vrot.lane.b32.xlu0 %v1192, 16
        %v1220 = vpop.permute.xlu0 %1219
        %1221 = vrot.lane.b32.xlu0 %v1202, 16
        %v1222 = vpop.permute.xlu0 %1221
        %1223 = vrot.lane.b32.xlu0 %v1195, 16
        %v1224 = vpop.permute.xlu0 %1223
        %1225 = vrot.lane.b32.xlu0 %v1204, 16
        %v1226 = vpop.permute.xlu0 %1225
        %1227 = vrot.lane.b32.xlu0 %v1198, 16
        %v1228 = vpop.permute.xlu0 %1227
        %1229 = vrot.lane.b32.xlu0 %v1206, 16
        %v1230 = vpop.permute.xlu0 %1229
        %v1231 = vsel %vm758, %v1224, %v1228
        %v1232 = vsel %vm758, %v1226, %v1230
        %v1233 = vsel %vm758, %v1220, %v1224
        %v1234 = vsel %vm758, %v1222, %v1226
        %v1235 = vsel %vm758, %v1216, %v1220
        %v1236 = vsel %vm758, %v1218, %v1222
        %v1237 = vsel %vm758, %v1228, %v1216
        %v1238 = vsel %vm758, %v1230, %v1218
        %1239 = vrot.lane.b32.xlu0 %v1189, 112
        %v1240 = vpop.permute.xlu0 %1239
        %1241 = vrot.lane.b32.xlu0 %v1200, 112
        %v1242 = vpop.permute.xlu0 %1241
        %1243 = vrot.lane.b32.xlu0 %v1192, 112
        %v1244 = vpop.permute.xlu0 %1243
        %1245 = vrot.lane.b32.xlu0 %v1202, 112
        %v1246 = vpop.permute.xlu0 %1245
        %1247 = vrot.lane.b32.xlu0 %v1195, 112
        %v1248 = vpop.permute.xlu0 %1247
        %1249 = vrot.lane.b32.xlu0 %v1204, 112
        %v1250 = vpop.permute.xlu0 %1249
        %1251 = vrot.lane.b32.xlu0 %v1198, 112
        %v1252 = vpop.permute.xlu0 %1251
        %1253 = vrot.lane.b32.xlu0 %v1206, 112
        %v1254 = vpop.permute.xlu0 %1253
        %v1255 = vsel %vm783, %v1248, %v1252
        %v1256 = vsel %vm783, %v1250, %v1254
        %v1257 = vsel %vm783, %v1244, %v1248
        %v1258 = vsel %vm783, %v1246, %v1250
        %v1259 = vsel %vm783, %v1240, %v1244
        %v1260 = vsel %vm783, %v1242, %v1246
        %v1261 = vsel %vm783, %v1252, %v1240
        %v1262 = vsel %vm783, %v1254, %v1242
        %s1263 = scalar_lea.vmem [#allocation9], 6
        %v1264 = vld [vmem:[%s1263] ss:$8 sm:$0xf]
        %v1266 = vlaneseq
        %v1267 = vshrl.u32 %v1266, 7
        %v1268 = vsub.s32 0, %v1267
        %v1269 = vrot.slane %v1264, %v1268
        %v1270 = vlaneseq
        %v1271 = vshrl.u32 %v1270, 7
        %v1272 = vsub.s32 1, %v1271
        %v1273 = vrot.slane %v1264, %v1272
        %v1274 = vlaneseq
        %v1275 = vshrl.u32 %v1274, 7
        %v1276 = vsub.s32 2, %v1275
        %v1277 = vrot.slane %v1264, %v1276
        %v1278 = vlaneseq
        %v1279 = vshrl.u32 %v1278, 7
        %v1280 = vsub.s32 3, %v1279
        %v1281 = vrot.slane %v1264, %v1280
        %v1286 = vmul.f32 %v1237, %v1269
        %v1287 = vmul.f32 %v1235, %v1273
        %v1288 = vmul.f32 %v1233, %v1277
        %v1289 = vmul.f32 %v1231, %v1281
        %v1290 = vmul.f32 %v1238, %v1269
        %v1291 = vmul.f32 %v1236, %v1273
        %v1292 = vmul.f32 %v1234, %v1277
        %v1293 = vmul.f32 %v1232, %v1281
        %v1294 = vadd.f32 %v1162, %v1286
        %v1295 = vadd.f32 %v1163, %v1287
        %v1296 = vadd.f32 %v1164, %v1288
        %v1297 = vadd.f32 %v1165, %v1289
        %v1298 = vadd.f32 %v1166, %v1290
        %v1299 = vadd.f32 %v1167, %v1291
        %v1300 = vadd.f32 %v1168, %v1292
        %v1301 = vadd.f32 %v1169, %v1293
        %s1302 = scalar_lea.vmem [#allocation9], 7
        %v1303 = vld [vmem:[%s1302] ss:$8 sm:$0xf]
        %v1305 = vlaneseq
        %v1306 = vshrl.u32 %v1305, 7
        %v1307 = vsub.s32 0, %v1306
        %v1308 = vrot.slane %v1303, %v1307
        %v1309 = vlaneseq
        %v1310 = vshrl.u32 %v1309, 7
        %v1311 = vsub.s32 1, %v1310
        %v1312 = vrot.slane %v1303, %v1311
        %v1313 = vlaneseq
        %v1314 = vshrl.u32 %v1313, 7
        %v1315 = vsub.s32 2, %v1314
        %v1316 = vrot.slane %v1303, %v1315
        %v1317 = vlaneseq
        %v1318 = vshrl.u32 %v1317, 7
        %v1319 = vsub.s32 3, %v1318
        %v1320 = vrot.slane %v1303, %v1319
        %v1325 = vmul.f32 %v1170, %v1308
        %v1326 = vmul.f32 %v1171, %v1312
        %v1327 = vmul.f32 %v1172, %v1316
        %v1328 = vmul.f32 %v1173, %v1320
        %v1329 = vmul.f32 %v912, %v1308
        %v1330 = vmul.f32 %v913, %v1312
        %v1331 = vmul.f32 %v914, %v1316
        %v1332 = vmul.f32 %v915, %v1320
        %v1333 = vmul.f32 %v1174, %v1308
        %v1334 = vmul.f32 %v1175, %v1312
        %v1335 = vmul.f32 %v1176, %v1316
        %v1336 = vmul.f32 %v1177, %v1320
        %v1349 = vrot.slane %v1325, 2
        %v1350 = vrot.slane %v1329, 2
        %v1351 = vsel %vm1186, %v1349, %v1350
        %v1352 = vrot.slane %v1326, 2
        %v1353 = vrot.slane %v1330, 2
        %v1354 = vsel %vm1186, %v1352, %v1353
        %v1355 = vrot.slane %v1327, 2
        %v1356 = vrot.slane %v1331, 2
        %v1357 = vsel %vm1186, %v1355, %v1356
        %v1358 = vrot.slane %v1328, 2
        %v1359 = vrot.slane %v1332, 2
        %v1360 = vsel %vm1186, %v1358, %v1359
        %v1361 = vrot.slane %v1333, 2
        %v1362 = vsel %vm1186, %v1350, %v1361
        %v1363 = vrot.slane %v1334, 2
        %v1364 = vsel %vm1186, %v1353, %v1363
        %v1365 = vrot.slane %v1335, 2
        %v1366 = vsel %vm1186, %v1356, %v1365
        %v1367 = vrot.slane %v1336, 2
        %v1368 = vsel %vm1186, %v1359, %v1367
        %v1377 = vadd.f32 %v1294, %v1351
        %v1378 = vadd.f32 %v1295, %v1354
        %v1379 = vadd.f32 %v1296, %v1357
        %v1380 = vadd.f32 %v1297, %v1360
        %v1381 = vadd.f32 %v1298, %v1362
        %v1382 = vadd.f32 %v1299, %v1364
        %v1383 = vadd.f32 %v1300, %v1366
        %v1384 = vadd.f32 %v1301, %v1368
        %s1385 = scalar_lea.vmem [#allocation9], 32
        %v1386 = vld [vmem:[%s1385] ss:$8 sm:$0xf]
        %v1388 = vlaneseq
        %v1389 = vshrl.u32 %v1388, 7
        %v1390 = vsub.s32 0, %v1389
        %v1391 = vrot.slane %v1386, %v1390
        %v1392 = vlaneseq
        %v1393 = vshrl.u32 %v1392, 7
        %v1394 = vsub.s32 1, %v1393
        %v1395 = vrot.slane %v1386, %v1394
        %v1396 = vlaneseq
        %v1397 = vshrl.u32 %v1396, 7
        %v1398 = vsub.s32 2, %v1397
        %v1399 = vrot.slane %v1386, %v1398
        %v1400 = vlaneseq
        %v1401 = vshrl.u32 %v1400, 7
        %v1402 = vsub.s32 3, %v1401
        %v1403 = vrot.slane %v1386, %v1402
        %v1408 = vmul.f32 %v1259, %v1391
        %v1409 = vmul.f32 %v1257, %v1395
        %v1410 = vmul.f32 %v1255, %v1399
        %v1411 = vmul.f32 %v1261, %v1403
        %v1412 = vmul.f32 %v1260, %v1391
        %v1413 = vmul.f32 %v1258, %v1395
        %v1414 = vmul.f32 %v1256, %v1399
        %v1415 = vmul.f32 %v1262, %v1403
        %v1416 = vadd.f32 %v1377, %v1408
        %v1417 = vadd.f32 %v1378, %v1409
        %v1418 = vadd.f32 %v1379, %v1410
        %v1419 = vadd.f32 %v1380, %v1411
        %v1420 = vadd.f32 %v1381, %v1412
        %v1421 = vadd.f32 %v1382, %v1413
        %v1422 = vadd.f32 %v1383, %v1414
        %v1423 = vadd.f32 %v1384, %v1415
        %v1424 = vld [vmem:[%s4] sm:$0xf]
        %v1426 = vlaneseq
        %v1427 = vshrl.u32 %v1426, 7
        %v1428 = vsub.s32 0, %v1427
        %v1429 = vrot.slane %v1424, %v1428
        %v1430 = vlaneseq
        %v1431 = vshrl.u32 %v1430, 7
        %v1432 = vsub.s32 1, %v1431
        %v1433 = vrot.slane %v1424, %v1432
        %v1434 = vlaneseq
        %v1435 = vshrl.u32 %v1434, 7
        %v1436 = vsub.s32 2, %v1435
        %v1437 = vrot.slane %v1424, %v1436
        %v1438 = vlaneseq
        %v1439 = vshrl.u32 %v1438, 7
        %v1440 = vsub.s32 3, %v1439
        %v1441 = vrot.slane %v1424, %v1440
        %v1446 = vadd.f32 %v1416, %v1429
        %v1447 = vadd.f32 %v1417, %v1433
        %v1448 = vadd.f32 %v1418, %v1437
        %v1449 = vadd.f32 %v1419, %v1441
        %v1450 = vadd.f32 %v1420, %v1429
        %v1451 = vadd.f32 %v1421, %v1433
        %v1452 = vadd.f32 %v1422, %v1437
        %v1453 = vadd.f32 %v1423, %v1441
        %v1454 = vmax.f32 %v1446, 0.0
        %v1455 = vmax.f32 %v1447, 0.0
        %v1456 = vmax.f32 %v1448, 0.0
        %v1457 = vmax.f32 %v1449, 0.0
        %v1458 = vmax.f32 %v1450, 0.0
        %v1459 = vmax.f32 %v1451, 0.0
        %v1460 = vmax.f32 %v1452, 0.0
        %v1461 = vmax.f32 %v1453, 0.0
        %v1462 = vmin.f32 %v1454, 6.0
        %v1463 = vmin.f32 %v1455, 6.0
        %v1464 = vmin.f32 %v1456, 6.0
        %v1465 = vmin.f32 %v1457, 6.0
        %v1466 = vmin.f32 %v1458, 6.0
        %v1467 = vmin.f32 %v1459, 6.0
        %v1468 = vmin.f32 %v1460, 6.0
        %v1469 = vmin.f32 %v1461, 6.0
        %v1470 = vpack.c.bf16 %v1466, %v1462
        %v1471 = vpack.c.bf16 %v1467, %v1463
        %v1472 = vld [vmem:[#allocation11] sm:$0xf]
        %v1473 = vld [vmem:[#allocation11 + $0x4] sm:$0xf]
        %v1474 = vld [vmem:[#allocation11 + $0x8] sm:$0xf]
        %v1475 = vld [vmem:[#allocation11 + $0xc] sm:$0xf]
        %v1476 = vld [vmem:[#allocation11 + $0x10] sm:$0xf]
        %v1477 = vld [vmem:[#allocation11 + $0x14] sm:$0xf]
        %v1478 = vld [vmem:[#allocation11 + $0x18] sm:$0xf]
        %v1479 = vld [vmem:[#allocation11 + $0x1c] sm:$0xf]
        %v1480 = vld [vmem:[#allocation11 + $0x20] sm:$0xf]
        %v1481 = vld [vmem:[#allocation11 + $0x24] sm:$0xf]
        %v1482 = vld [vmem:[#allocation11 + $0x28] sm:$0xf]
        %v1483 = vld [vmem:[#allocation11 + $0x2c] sm:$0xf]
        %v1484 = vld [vmem:[#allocation11 + $0x30] sm:$0xf]
        %v1485 = vld [vmem:[#allocation11 + $0x34] sm:$0xf]
        %v1486 = vld [vmem:[#allocation11 + $0x38] sm:$0xf]
        %v1487 = vld [vmem:[#allocation11 + $0x3c] sm:$0xf]
        %v1488 = vld [vmem:[#allocation11 + $0x40] sm:$0xf]
        %v1489 = vld [vmem:[#allocation11 + $0x44] sm:$0xf]
        %v1490 = vld [vmem:[#allocation11 + $0x48] sm:$0xf]
        %v1491 = vld [vmem:[#allocation11 + $0x4c] sm:$0xf]
        %v1492 = vld [vmem:[#allocation11 + $0x50] sm:$0xf]
        %v1493 = vld [vmem:[#allocation11 + $0x54] sm:$0xf]
        %v1494 = vld [vmem:[#allocation11 + $0x58] sm:$0xf]
        %v1495 = vld [vmem:[#allocation11 + $0x5c] sm:$0xf]
        %v1496 = vld [vmem:[#allocation11 + $0x60] sm:$0xf]
        %v1497 = vld [vmem:[#allocation11 + $0x64] sm:$0xf]
        %v1498 = vld [vmem:[#allocation11 + $0x68] sm:$0xf]
        %v1499 = vld [vmem:[#allocation11 + $0x6c] sm:$0xf]
        %v1500 = vld [vmem:[#allocation11 + $0x70] sm:$0xf]
        %v1501 = vld [vmem:[#allocation11 + $0x74] sm:$0xf]
        %v1502 = vld [vmem:[#allocation11 + $0x78] sm:$0xf]
        %v1503 = vld [vmem:[#allocation11 + $0x7c] sm:$0xf]
        %v1504 = vld [vmem:[%s6] sm:$0x1]
        %v1506 = vlaneseq
        %v1507 = vshrl.u32 %v1506, 7
        %v1508 = vsub.s32 0, %v1507
        %v1509 = vrot.slane %v1504, %v1508
        %v1543 = vunpack.c.l.b16 %v1472
        %v1544 = vunpack.c.l.b16 %v1473
        %v1545 = vunpack.c.l.b16 %v1474
        %v1546 = vunpack.c.l.b16 %v1475
        %v1547 = vunpack.c.l.b16 %v1476
        %v1548 = vunpack.c.l.b16 %v1477
        %v1549 = vunpack.c.l.b16 %v1478
        %v1550 = vunpack.c.l.b16 %v1479
        %v1551 = vunpack.c.l.b16 %v1480
        %v1552 = vunpack.c.l.b16 %v1481
        %v1553 = vunpack.c.l.b16 %v1482
        %v1554 = vunpack.c.l.b16 %v1483
        %v1555 = vunpack.c.l.b16 %v1484
        %v1556 = vunpack.c.l.b16 %v1485
        %v1557 = vunpack.c.l.b16 %v1486
        %v1558 = vunpack.c.l.b16 %v1487
        %v1559 = vunpack.c.l.b16 %v1488
        %v1560 = vunpack.c.l.b16 %v1489
        %v1561 = vunpack.c.l.b16 %v1490
        %v1562 = vunpack.c.l.b16 %v1491
        %v1563 = vunpack.c.l.b16 %v1492
        %v1564 = vunpack.c.l.b16 %v1493
        %v1565 = vunpack.c.l.b16 %v1494
        %v1566 = vunpack.c.l.b16 %v1495
        %v1567 = vunpack.c.l.b16 %v1496
        %v1568 = vunpack.c.l.b16 %v1497
        %v1569 = vunpack.c.l.b16 %v1498
        %v1570 = vunpack.c.l.b16 %v1499
        %v1571 = vunpack.c.l.b16 %v1500
        %v1572 = vunpack.c.l.b16 %v1501
        %v1573 = vunpack.c.l.b16 %v1502
        %v1574 = vunpack.c.l.b16 %v1503
        %v1575 = vpack.c.b16 %v1544, %v1543
        %v1576 = vpack.c.b16 %v1546, %v1545
        %v1577 = vpack.c.b16 %v1548, %v1547
        %v1578 = vpack.c.b16 %v1550, %v1549
        %v1579 = vpack.c.b16 %v1552, %v1551
        %v1580 = vpack.c.b16 %v1554, %v1553
        %v1581 = vpack.c.b16 %v1556, %v1555
        %v1582 = vpack.c.b16 %v1558, %v1557
        %v1583 = vpack.c.b16 %v1560, %v1559
        %v1584 = vpack.c.b16 %v1562, %v1561
        %v1585 = vpack.c.b16 %v1564, %v1563
        %v1586 = vpack.c.b16 %v1566, %v1565
        %v1587 = vpack.c.b16 %v1568, %v1567
        %v1588 = vpack.c.b16 %v1570, %v1569
        %v1589 = vpack.c.b16 %v1572, %v1571
        %v1590 = vpack.c.b16 %v1574, %v1573
        %1607 = vmatprep.subr.bf16.mxu0 0
        %1608 = vmatpush1.bf16.msra.mxu0 %v1582
        %1609 = vmatprep.subr.bf16.mxu0 0
        %1610 = vmatpush1.bf16.msra.mxu0 %v1581
        %1611 = vmatprep.subr.bf16.mxu0 0
        %1612 = vmatpush1.bf16.msra.mxu0 %v1580
        %1613 = vmatprep.subr.bf16.mxu0 0
        %1614 = vmatpush1.bf16.msra.mxu0 %v1579
        %1615 = vmatprep.subr.bf16.mxu0 0
        %1616 = vmatpush1.bf16.msra.mxu0 %v1578
        %1617 = vmatprep.subr.bf16.mxu0 0
        %1618 = vmatpush1.bf16.msra.mxu0 %v1577
        %1619 = vmatprep.subr.bf16.mxu0 0
        %1620 = vmatpush1.bf16.msra.mxu0 %v1576
        %1621 = vmatprep.subr.bf16.mxu0 0
        %1622 = vmatpush1.bf16.msra.mxu0 %v1575
        %1623 = vmatprep.subr.bf16.mxu0 0
        %1624 = vmatpush2.bf16.msra.mxu0 %v1590
        %1625 = vmatprep.subr.bf16.mxu0 0
        %1626 = vmatpush2.bf16.msra.mxu0 %v1589
        %1627 = vmatprep.subr.bf16.mxu0 0
        %1628 = vmatpush2.bf16.msra.mxu0 %v1588
        %1629 = vmatprep.subr.bf16.mxu0 0
        %1630 = vmatpush2.bf16.msra.mxu0 %v1587
        %1631 = vmatprep.subr.bf16.mxu0 0
        %1632 = vmatpush2.bf16.msra.mxu0 %v1586
        %1633 = vmatprep.subr.bf16.mxu0 0
        %1634 = vmatpush2.bf16.msra.mxu0 %v1585
        %1635 = vmatprep.subr.bf16.mxu0 0
        %1636 = vmatpush2.bf16.msra.mxu0 %v1584
        %1637 = vmatprep.subr.bf16.mxu0 0
        %1638 = vmatpush2.bf16.msra.mxu0 %v1583
        %1639 = vmatprep.mubr.bf16.mxu0 %v1471
        %1640 = vmatmul.mubr.bf16.gmra.mxu0 %v1470
        %v1641 = vpop.f32.mrf.mxu0
        %v1642 = vadd.f32 %v1509, %v1641
        %v1643 = vpop.f32.mrf.mxu0
        %v1644 = vpop.f32.mrf.mxu0
        %v1645 = vadd.f32 %v1509, %v1644
        %v1646 = vpop.f32.mrf.mxu0
        %1647 = vdwg.mxu0
        %v1648 = vld [vmem:[%s306] sm:$0xff]
        %v1649 = vld [vmem:[%s306 + $0x10] sm:$0xff]
        %v1650 = vadd.f32 %v1642, %v1648
        %v1651 = vadd.f32 %v1645, %v1649
        %1652 = vst [vmem:[%s352] sm:$0xff] %v1650
        %1653 = vst [vmem:[%s352 + $0x10] sm:$0xff] %v1651
        %v1654 = vpack.c.bf16 %v1468, %v1464
        %v1655 = vpack.c.bf16 %v1469, %v1465
        %v1656 = vld [vmem:[#allocation11] sm:$0xf]
        %v1657 = vld [vmem:[#allocation11 + $0x4] sm:$0xf]
        %v1658 = vld [vmem:[#allocation11 + $0x8] sm:$0xf]
        %v1659 = vld [vmem:[#allocation11 + $0xc] sm:$0xf]
        %v1660 = vld [vmem:[#allocation11 + $0x10] sm:$0xf]
        %v1661 = vld [vmem:[#allocation11 + $0x14] sm:$0xf]
        %v1662 = vld [vmem:[#allocation11 + $0x18] sm:$0xf]
        %v1663 = vld [vmem:[#allocation11 + $0x1c] sm:$0xf]
        %v1664 = vld [vmem:[#allocation11 + $0x20] sm:$0xf]
        %v1665 = vld [vmem:[#allocation11 + $0x24] sm:$0xf]
        %v1666 = vld [vmem:[#allocation11 + $0x28] sm:$0xf]
        %v1667 = vld [vmem:[#allocation11 + $0x2c] sm:$0xf]
        %v1668 = vld [vmem:[#allocation11 + $0x30] sm:$0xf]
        %v1669 = vld [vmem:[#allocation11 + $0x34] sm:$0xf]
        %v1670 = vld [vmem:[#allocation11 + $0x38] sm:$0xf]
        %v1671 = vld [vmem:[#allocation11 + $0x3c] sm:$0xf]
        %v1672 = vld [vmem:[#allocation11 + $0x40] sm:$0xf]
        %v1673 = vld [vmem:[#allocation11 + $0x44] sm:$0xf]
        %v1674 = vld [vmem:[#allocation11 + $0x48] sm:$0xf]
        %v1675 = vld [vmem:[#allocation11 + $0x4c] sm:$0xf]
        %v1676 = vld [vmem:[#allocation11 + $0x50] sm:$0xf]
        %v1677 = vld [vmem:[#allocation11 + $0x54] sm:$0xf]
        %v1678 = vld [vmem:[#allocation11 + $0x58] sm:$0xf]
        %v1679 = vld [vmem:[#allocation11 + $0x5c] sm:$0xf]
        %v1680 = vld [vmem:[#allocation11 + $0x60] sm:$0xf]
        %v1681 = vld [vmem:[#allocation11 + $0x64] sm:$0xf]
        %v1682 = vld [vmem:[#allocation11 + $0x68] sm:$0xf]
        %v1683 = vld [vmem:[#allocation11 + $0x6c] sm:$0xf]
        %v1684 = vld [vmem:[#allocation11 + $0x70] sm:$0xf]
        %v1685 = vld [vmem:[#allocation11 + $0x74] sm:$0xf]
        %v1686 = vld [vmem:[#allocation11 + $0x78] sm:$0xf]
        %v1687 = vld [vmem:[#allocation11 + $0x7c] sm:$0xf]
        %v1688 = vld [vmem:[%s6 + $0x1] sm:$0x1]
        %v1690 = vlaneseq
        %v1691 = vshrl.u32 %v1690, 7
        %v1692 = vsub.s32 0, %v1691
        %v1693 = vrot.slane %v1688, %v1692
        %v1727 = vunpack.c.l.b16 %v1656
        %v1728 = vunpack.c.l.b16 %v1657
        %v1729 = vunpack.c.l.b16 %v1658
        %v1730 = vunpack.c.l.b16 %v1659
        %v1731 = vunpack.c.l.b16 %v1660
        %v1732 = vunpack.c.l.b16 %v1661
        %v1733 = vunpack.c.l.b16 %v1662
        %v1734 = vunpack.c.l.b16 %v1663
        %v1735 = vunpack.c.l.b16 %v1664
        %v1736 = vunpack.c.l.b16 %v1665
        %v1737 = vunpack.c.l.b16 %v1666
        %v1738 = vunpack.c.l.b16 %v1667
        %v1739 = vunpack.c.l.b16 %v1668
        %v1740 = vunpack.c.l.b16 %v1669
        %v1741 = vunpack.c.l.b16 %v1670
        %v1742 = vunpack.c.l.b16 %v1671
        %v1743 = vunpack.c.l.b16 %v1672
        %v1744 = vunpack.c.l.b16 %v1673
        %v1745 = vunpack.c.l.b16 %v1674
        %v1746 = vunpack.c.l.b16 %v1675
        %v1747 = vunpack.c.l.b16 %v1676
        %v1748 = vunpack.c.l.b16 %v1677
        %v1749 = vunpack.c.l.b16 %v1678
        %v1750 = vunpack.c.l.b16 %v1679
        %v1751 = vunpack.c.l.b16 %v1680
        %v1752 = vunpack.c.l.b16 %v1681
        %v1753 = vunpack.c.l.b16 %v1682
        %v1754 = vunpack.c.l.b16 %v1683
        %v1755 = vunpack.c.l.b16 %v1684
        %v1756 = vunpack.c.l.b16 %v1685
        %v1757 = vunpack.c.l.b16 %v1686
        %v1758 = vunpack.c.l.b16 %v1687
        %v1759 = vpack.c.b16 %v1728, %v1727
        %v1760 = vpack.c.b16 %v1730, %v1729
        %v1761 = vpack.c.b16 %v1732, %v1731
        %v1762 = vpack.c.b16 %v1734, %v1733
        %v1763 = vpack.c.b16 %v1736, %v1735
        %v1764 = vpack.c.b16 %v1738, %v1737
        %v1765 = vpack.c.b16 %v1740, %v1739
        %v1766 = vpack.c.b16 %v1742, %v1741
        %v1767 = vpack.c.b16 %v1744, %v1743
        %v1768 = vpack.c.b16 %v1746, %v1745
        %v1769 = vpack.c.b16 %v1748, %v1747
        %v1770 = vpack.c.b16 %v1750, %v1749
        %v1771 = vpack.c.b16 %v1752, %v1751
        %v1772 = vpack.c.b16 %v1754, %v1753
        %v1773 = vpack.c.b16 %v1756, %v1755
        %v1774 = vpack.c.b16 %v1758, %v1757
        %1791 = vmatprep.subr.bf16.mxu0 0
        %1792 = vmatpush1.bf16.msra.mxu0 %v1766
        %1793 = vmatprep.subr.bf16.mxu0 0
        %1794 = vmatpush1.bf16.msra.mxu0 %v1765
        %1795 = vmatprep.subr.bf16.mxu0 0
        %1796 = vmatpush1.bf16.msra.mxu0 %v1764
        %1797 = vmatprep.subr.bf16.mxu0 0
        %1798 = vmatpush1.bf16.msra.mxu0 %v1763
        %1799 = vmatprep.subr.bf16.mxu0 0
        %1800 = vmatpush1.bf16.msra.mxu0 %v1762
        %1801 = vmatprep.subr.bf16.mxu0 0
        %1802 = vmatpush1.bf16.msra.mxu0 %v1761
        %1803 = vmatprep.subr.bf16.mxu0 0
        %1804 = vmatpush1.bf16.msra.mxu0 %v1760
        %1805 = vmatprep.subr.bf16.mxu0 0
        %1806 = vmatpush1.bf16.msra.mxu0 %v1759
        %1807 = vmatprep.subr.bf16.mxu0 0
        %1808 = vmatpush2.bf16.msra.mxu0 %v1774
        %1809 = vmatprep.subr.bf16.mxu0 0
        %1810 = vmatpush2.bf16.msra.mxu0 %v1773
        %1811 = vmatprep.subr.bf16.mxu0 0
        %1812 = vmatpush2.bf16.msra.mxu0 %v1772
        %1813 = vmatprep.subr.bf16.mxu0 0
        %1814 = vmatpush2.bf16.msra.mxu0 %v1771
        %1815 = vmatprep.subr.bf16.mxu0 0
        %1816 = vmatpush2.bf16.msra.mxu0 %v1770
        %1817 = vmatprep.subr.bf16.mxu0 0
        %1818 = vmatpush2.bf16.msra.mxu0 %v1769
        %1819 = vmatprep.subr.bf16.mxu0 0
        %1820 = vmatpush2.bf16.msra.mxu0 %v1768
        %1821 = vmatprep.subr.bf16.mxu0 0
        %1822 = vmatpush2.bf16.msra.mxu0 %v1767
        %1823 = vmatprep.mubr.bf16.mxu0 %v1655
        %1824 = vmatmul.mubr.bf16.gmra.mxu0 %v1654
        %v1825 = vpop.f32.mrf.mxu0
        %v1826 = vadd.f32 %v1693, %v1825
        %v1827 = vpop.f32.mrf.mxu0
        %v1828 = vpop.f32.mrf.mxu0
        %v1829 = vadd.f32 %v1693, %v1828
        %v1830 = vpop.f32.mrf.mxu0
        %1831 = vdwg.mxu0
        %v1832 = vld [vmem:[%s306 + $0x8] sm:$0xff]
        %v1833 = vld [vmem:[%s306 + $0x18] sm:$0xff]
        %v1834 = vadd.f32 %v1826, %v1832
        %v1835 = vadd.f32 %v1829, %v1833
        %1836 = vst [vmem:[%s352 + $0x8] sm:$0xff] %v1834
        %1837 = vst [vmem:[%s352 + $0x18] sm:$0xff] %v1835
        %s1838 = sand.u32 %s186, 1
        %s1839 = scalar_lea.sflag [#allocation5], %s1838
        %s1840 = sand.u32 %s186, 1
        %s1841 = smul.addr %s1840, 32
        %s1842 = scalar_lea.vmem [#allocation12], %s1841
        // Predicated region
        $region69: #{tpu_custom_call.1} parent=47 // pred_check
          %p1843 = pneg %p196
        $region70: #{tpu_custom_call.1} parent=47 // pred_check_branch
          %1845 = sbr.rel (%p1843) target = $region72
        $region71: #{tpu_custom_call.1} parent=47 // pred_region
          %s1847 = ssub.s32 512, 512
          %1848 = vsyncadd %s1839, %s1847
          %s1849 = smul.addr %s26, 4
          %s1850 = smul.addr %s1849, 128
          %s1851 = scalar_lea.hbm %s7, %s1850
          %s1852 = sshll.u32 %s1842, 4
          %s1853 = int_to_ptr.vmem [resolvable:$true] %s1852
          %1858 = dma.vmem_to_hbm [thread:$0]  %s1853, 512, %s1851, %s1839, 256, 256, 16
        $region72: #{tpu_custom_call.1} parent=47 // pred_fallthru
          _
      $region48: #{tpu_custom_call.1} parent=5 // pred_fallthru
        _
      %p1859 = scmp.le.s32.totalorder 2, %s21
      // Predicated region
      $region73: #{tpu_custom_call.1} parent=5 // pred_check
        %p1860 = pneg %p1859
      $region74: #{tpu_custom_call.1} parent=5 // pred_check_branch
        %1862 = sbr.rel (%p1860) target = $region76
      $region75: #{tpu_custom_call.1} parent=5 // pred_region
        %s1863 = ssub.s32 %s21, 2
        // Predicated region
        $region77: #{tpu_custom_call.1} parent=75 // pred_check
          %p1864 = pneg %p202
        $region78: #{tpu_custom_call.1} parent=75 // pred_check_branch
          %1866 = sbr.rel (%p1864) target = $region80
        $region79: #{tpu_custom_call.1} parent=75 // pred_region
          %s1867 = sand.u32 %s187, 1
          %s1868 = scalar_lea.sflag [#allocation5], %s1867
          %s1869 = sand.u32 %s187, 1
          %s1870 = smul.addr %s1869, 32
          %s1871 = scalar_lea.vmem [#allocation12], %s1870
          %1872 = dma.done %s1868, 512
        $region80: #{tpu_custom_call.1} parent=75 // pred_fallthru
          _
      $region76: #{tpu_custom_call.1} parent=5 // pred_fallthru
        _
    $region6: #{tpu_custom_call.1} parent=1 // loop_footer
      %s25 = sadd.s32 1, %s21
    $region7: #{tpu_custom_call.1} parent=1 // loop_footer_branch
      %20 = sbr.rel target = $region3
    $region8: #{tpu_custom_call.1} parent=1 // loop_exit
      _
    %1873 = vsyncpa [#allocation4], 1
    %s1874 = scalar_lea.sflag [#allocation4], 1
    %1875 = vsyncpa %s1874, 1
    %1876 = vsyncpa [#allocation7], 1
    %1877 = vsyncpa [#allocation10], 1
    %1878 = vsyncpa [#allocation5], 1
    %s1879 = scalar_lea.sflag [#allocation5], 1
    %1880 = vsyncpa %s1879, 1

</llo_original>
